<compile_context>
chip_gen: v7x
topology: tpu7x:2x2x1
jax: 0.10.0
libtpu: 0.0.40
codegen_flags: <defaults>
</compile_context>

<pallas_src>
import functools

import jax
import jax.numpy as jnp
import numpy as np
from jax import lax
from jax.experimental import pallas as pl
from jax.experimental.pallas import tpu as pltpu

LANE = 128
SUBLANE = 8


# --------------------------------- helpers -----------------------------------
def _round_up(x, m):
    return ((x + m - 1) // m) * m


def _pad_gate_rows(w, H, Hp):
    """Pad PyTorch-gate-blocked rows (4H, ...) -> (4Hp, ...).

    Gate k (i, f, g, o) occupies rows [k*Hp, k*Hp+H); padded rows are zero.
    Works for 2-D weights and 1-D biases.
    """
    w4 = w.reshape((4, H) + w.shape[1:])
    pad = [(0, 0), (0, Hp - H)] + [(0, 0)] * (w.ndim - 1)
    return jnp.pad(w4, pad).reshape((4 * Hp,) + w.shape[1:])


def _pick_time_chunk(S, Bp, Hp, *, budget_bytes=40 << 20, t_cap=32):
    """Largest time-chunk T whose pipelined VMEM footprint fits the budget.

    Returns (T, estimated_vmem_bytes).
    """
    f32, bf16 = 4, 2
    # Grid-invariant allocations: bf16 W_hh^T (double-buffered by the default
    # pipeline), the final-cell output block, and the h/c state scratch.
    fixed = 2 * (Hp * 4 * Hp) * bf16 + 3 * (Bp * Hp) * f32
    # Per-time-step, double-buffered: one gx row + one out row.
    per_t = 2 * (Bp * 4 * Hp) * f32 + 2 * (Bp * Hp) * f32
    avail = max(budget_bytes - fixed, per_t)
    T = max(1, min(t_cap, avail // per_t, S))
    return int(T), int(fixed + T * per_t)


# ------------------------------ Pallas kernel ---------------------------------
def _lstm_chunk_kernel(gx_ref, whh_ref, out_ref, cN_ref, h_sc, c_sc, *,
                       steps, seq_len):
    """Runs up to `steps` LSTM time steps per grid iteration.

    gx_ref : (T, Bp, 4Hp) f32   precomputed x @ W_ih^T + bias for this chunk
    whh_ref: (Hp, 4Hp)    bf16  recurrent weight (grid-invariant)
    out_ref: (T, Bp, Hp)  f32   per-step hidden states
    cN_ref : (1, Bp, Hp)  f32   final cell state (resident output block)
    h_sc/c_sc: (Bp, Hp)   f32   recurrent state carried across grid steps
    PyTorch gate order: i, f, g, o.
    """
    chunk = pl.program_id(0)

    @pl.when(chunk == 0)
    def _init():
        h_sc[...] = jnp.zeros_like(h_sc)
        c_sc[...] = jnp.zeros_like(c_sc)

    Hp = h_sc.shape[-1]
    t0 = chunk * steps

    def body(t, carry):
        h_prev, c_prev = carry
        # Serial half only: h_{t-1} @ W_hh^T on the MXU (bf16 in, f32 acc).
        gates = gx_ref[t] + jnp.dot(h_prev.astype(whh_ref.dtype), whh_ref[...],
                                    preferred_element_type=jnp.float32)
        i_g = jax.nn.sigmoid(gates[:, 0 * Hp:1 * Hp])
        f_g = jax.nn.sigmoid(gates[:, 1 * Hp:2 * Hp])
        g_g = jnp.tanh(gates[:, 2 * Hp:3 * Hp])
        o_g = jax.nn.sigmoid(gates[:, 3 * Hp:4 * Hp])
        c_new = f_g * c_prev + i_g * g_g
        h_new = o_g * jnp.tanh(c_new)
        out_ref[t] = h_new          # OOB tail rows are clipped at HBM writeback
        # Tail mask: steps past seq_len (partial last chunk) must not advance
        # the recurrent state.
        valid = (t0 + t) < seq_len
        return (jnp.where(valid, h_new, h_prev),
                jnp.where(valid, c_new, c_prev))

    h_fin, c_fin = lax.fori_loop(0, steps, body, (h_sc[...], c_sc[...]),
                                 unroll=min(steps, 8))
    h_sc[...] = h_fin
    c_sc[...] = c_fin

    # Final cell state is only needed once, on the last chunk.
    @pl.when(chunk == pl.num_programs(0) - 1)
    def _final():
        cN_ref[0] = c_sc[...]


def lstm_pallas(embedded, w_ih, w_hh, b_ih, b_hh, *, max_steps=32):
    """embedded: (S, B, E) f32.  w_ih: (4H, E), w_hh: (4H, H), biases: (4H,).

    Returns (outputs (S,B,H), hidden (1,B,H), cell (1,B,H)).
    """
    S, B, E = embedded.shape
    H = w_hh.shape[1]

    Hp = _round_up(H, LANE)
    Bp = _round_up(B, SUBLANE)

    # --- gate-blocked, lane-aligned weights -----------------------------------
    # Padded gate rows are zero, so padded H lanes of every gate pre-activation
    # are exactly 0 and the padded h/c lanes stay 0 for all time steps.
    wih_p = _pad_gate_rows(w_ih, H, Hp)                       # (4Hp, E)
    whh_p = _pad_gate_rows(w_hh, H, Hp)                       # (4Hp, H)
    whh_p = jnp.pad(whh_p, ((0, 0), (0, Hp - H)))             # (4Hp, Hp)
    bias_p = _pad_gate_rows(b_ih + b_hh, H, Hp)               # (4Hp,)
    # bf16 recurrent weight: MXU-native on all generations, halves resident VMEM.
    whh_t = whh_p.T.astype(jnp.bfloat16)                      # (Hp, 4Hp)

    # --- input projection hoisted out of the recurrence -----------------------
    # Pad the (small) embedded tensor's batch dim BEFORE the matmul so the big
    # gx intermediate comes out already padded (no extra HBM round-trip).
    if Bp != B:
        embedded = jnp.pad(embedded, ((0, 0), (0, Bp - B), (0, 0)))
    gx = jnp.einsum("sbe,ge->sbg", embedded, wih_p,
                    preferred_element_type=jnp.float32) + bias_p   # (S, Bp, 4Hp)
    # TODO(synk): on v6e/v7x, store gx in bf16 (halves the dominant HBM->VMEM
    # stream and gx VMEM); kept f32 here since v5e's VPU has no native bf16.

    # --- time chunking (VMEM-budgeted, cdiv grid + tail masking) ---------------
    T, vmem_est = _pick_time_chunk(S, Bp, Hp, t_cap=max_steps)
    n_chunks = pl.cdiv(S, T)

    grid_spec = pltpu.PrefetchScalarGridSpec(
        num_scalar_prefetch=0,
        grid=(n_chunks,),
        in_specs=[
            pl.BlockSpec((T, Bp, 4 * Hp), lambda c: (c, 0, 0)),   # gx chunk
            # Grid-invariant recurrent weight.
            # TODO(synk): pipeline_mode=pl.Buffered(1) would drop its unused
            # second pipeline buffer (saves Hp*4Hp*2 bytes on v7x).
            pl.BlockSpec((Hp, 4 * Hp), lambda c: (0, 0)),         # W_hh^T
        ],
        out_specs=[
            pl.BlockSpec((T, Bp, Hp), lambda c: (c, 0, 0)),       # outputs chunk
            pl.BlockSpec((1, Bp, Hp), lambda c: (0, 0, 0)),       # final cell
        ],
        scratch_shapes=[
            pltpu.VMEM((Bp, Hp), jnp.float32),                    # h state
            pltpu.VMEM((Bp, Hp), jnp.float32),                    # c state
        ],
    )

    vmem_limit = int(min(max(int(vmem_est * 1.25), 32 << 20), 56 << 20))

    out_p, cN_p = pl.pallas_call(
        functools.partial(_lstm_chunk_kernel, steps=T, seq_len=S),
        grid_spec=grid_spec,
        out_shape=(
            jax.ShapeDtypeStruct((S, Bp, Hp), jnp.float32),
            jax.ShapeDtypeStruct((1, Bp, Hp), jnp.float32),
        ),
        compiler_params=pltpu.CompilerParams(
            dimension_semantics=("arbitrary",),      # serial recurrence
            vmem_limit_bytes=vmem_limit,
        ),
    )(gx, whh_t)
    # TODO(synk): on v7x add a leading 'parallel' batch-tile grid axis so the
    # two TensorCores split the (independent) batch rows.

    # Only slice when padding actually exists (slice = extra HBM copy).
    if B == Bp and H == Hp:
        outputs, cell = out_p, cN_p
    else:
        outputs, cell = out_p[:, :B, :H], cN_p[:, :B, :H]
    hidden = outputs[-1:]                        # (1, B, H) == last hidden state
    return outputs, hidden, cell


# ------------------------------ Encoder wrapper --------------------------------
def init_encoder_params(key, input_dim, emb_dim, hid_dim):
    k_emb, k1, k2, k3, k4 = jax.random.split(key, 5)
    bound = 1.0 / np.sqrt(hid_dim)
    return {
        "embedding": jax.random.normal(k_emb, (input_dim, emb_dim), jnp.float32),
        "w_ih": jax.random.uniform(k1, (4 * hid_dim, emb_dim), jnp.float32,
                                   -bound, bound),
        "w_hh": jax.random.uniform(k2, (4 * hid_dim, hid_dim), jnp.float32,
                                   -bound, bound),
        "b_ih": jax.random.uniform(k3, (4 * hid_dim,), jnp.float32, -bound, bound),
        "b_hh": jax.random.uniform(k4, (4 * hid_dim,), jnp.float32, -bound, bound),
    }


@jax.jit
def encoder_forward(params, src):
    # Embedding lookup (glue) — src: (S, B) int32 -> (S, B, E) f32.
    embedded = jnp.take(params["embedding"], src, axis=0)
    # Dropout: eval-mode identity (inference semantics of nn.Dropout).
    # TODO(synk): training-mode dropout mask would need pltpu.prng_* or an
    # XLA-side mask on `embedded`.
    outputs, hidden, cell = lstm_pallas(
        embedded, params["w_ih"], params["w_hh"], params["b_ih"], params["b_hh"])
    return outputs, hidden, cell


# ---------------------------- pure-JAX reference -------------------------------
def encoder_reference(params, src):
    embedded = jnp.take(params["embedding"], src, axis=0)
    S, B, E = embedded.shape
    H = params["w_hh"].shape[1]
    wih_t = params["w_ih"].T
    whh_t = params["w_hh"].T
    bias = params["b_ih"] + params["b_hh"]

    def step(carry, x):
        h, c = carry
        gates = x @ wih_t + h @ whh_t + bias
        i = jax.nn.sigmoid(gates[:, 0 * H:1 * H])
        f = jax.nn.sigmoid(gates[:, 1 * H:2 * H])
        g = jnp.tanh(gates[:, 2 * H:3 * H])
        o = jax.nn.sigmoid(gates[:, 3 * H:4 * H])
        c_new = f * c + i * g
        h_new = o * jnp.tanh(c_new)
        return (h_new, c_new), h_new

    h0 = jnp.zeros((B, H), jnp.float32)
    c0 = jnp.zeros((B, H), jnp.float32)
    (hN, cN), outs = jax.lax.scan(step, (h0, c0), embedded)
    return outs, hN[None], cN[None]


# ----------------------------------- main ---------------------------------------
if __name__ == "__main__":
    INPUT_DIM, EMB_DIM, HID_DIM = 16, 32, 32
    SEQ_LEN, BATCH = 8, 4

    key = jax.random.PRNGKey(0)
    k_params, k_src = jax.random.split(key)
    params = init_encoder_params(k_params, INPUT_DIM, EMB_DIM, HID_DIM)
    src = jax.random.randint(k_src, (SEQ_LEN, BATCH), 0, INPUT_DIM, jnp.int32)

    outputs, hidden, cell = encoder_forward(params, src)
    jax.block_until_ready((outputs, hidden, cell))

    ref_out, ref_h, ref_c = encoder_reference(params, src)
    # bf16 recurrent weights (f32 accumulation) -> looser tolerance than pure f32.
    np.testing.assert_allclose(np.asarray(outputs), np.asarray(ref_out),
                               rtol=2e-2, atol=2e-2)
    np.testing.assert_allclose(np.asarray(hidden), np.asarray(ref_h),
                               rtol=2e-2, atol=2e-2)
    np.testing.assert_allclose(np.asarray(cell), np.asarray(ref_c),
                               rtol=2e-2, atol=2e-2)

    assert outputs.shape == (SEQ_LEN, BATCH, HID_DIM)
    assert hidden.shape == (1, BATCH, HID_DIM)
    assert cell.shape == (1, BATCH, HID_DIM)

    # Extra check exercising the multi-chunk path + partial-tail masking
    # (max_steps=3 over S=8 -> chunks of 3, 3, 2).
    embedded = jnp.take(params["embedding"], src, axis=0)
    out2, hid2, cell2 = jax.jit(functools.partial(lstm_pallas, max_steps=3))(
        embedded, params["w_ih"], params["w_hh"], params["b_ih"], params["b_hh"])
    jax.block_until_ready((out2, hid2, cell2))
    np.testing.assert_allclose(np.asarray(out2), np.asarray(ref_out),
                               rtol=2e-2, atol=2e-2)
    np.testing.assert_allclose(np.asarray(cell2), np.asarray(ref_c),
                               rtol=2e-2, atol=2e-2)

    print("KERNEL_OK")
</pallas_src>

<mosaic_0001>
module attributes {stable_mosaic.version = 11 : i64} {
  func.func @_lstm_chunk_kernel(%arg0: i32, %arg1: memref<8x8x512xf32, #tpu.memory_space<vmem>>, %arg2: memref<128x512xbf16, #tpu.memory_space<vmem>>, %arg3: memref<8x8x128xf32, #tpu.memory_space<vmem>>, %arg4: memref<1x8x128xf32, #tpu.memory_space<vmem>>, %arg5: memref<8x128xf32, #tpu.memory_space<vmem>>, %arg6: memref<8x128xf32, #tpu.memory_space<vmem>>) attributes {dimension_semantics = [#tpu.dimension_semantics<arbitrary>], iteration_bounds = array<i64: 1>, scalar_prefetch = 0 : i64, scratch_operands = 2 : i64, tpu.core_type = #tpu.core_type<tc>, window_params = [{transform_indices = @transform_0, window_bounds = array<i64: 8, 8, 512>}, {pipeline_mode = #tpu.pipeline_mode<synchronous>, transform_indices = @transform_1, window_bounds = array<i64: 128, 512>}, {transform_indices = @transform_2, window_bounds = array<i64: 8, 8, 128>}, {pipeline_mode = #tpu.pipeline_mode<synchronous>, transform_indices = @transform_3, window_bounds = array<i64: 1, 8, 128>}]} {
    %c0_i32 = arith.constant 0 : i32
    %0 = arith.cmpi eq, %arg0, %c0_i32 : i32
    %1 = arith.extui %0 : i1 to i32
    %c0_i32_0 = arith.constant 0 : i32
    %2 = arith.cmpi ne, %1, %c0_i32_0 : i32
    scf.if %2 {
      %cst_99 = arith.constant 0.000000e+00 : f32
      %331 = vector.broadcast %cst_99 : f32 to vector<8x128xf32>
      %c0_100 = arith.constant 0 : index
      %c0_101 = arith.constant 0 : index
      %332 = vector.load %arg5[%c0_100, %c0_101] : memref<8x128xf32, #tpu.memory_space<vmem>>, vector<8x128xf32>
      tpu.vector_store %arg5[%c0_100, %c0_101], %331 {strides = array<i32>} : memref<8x128xf32, #tpu.memory_space<vmem>>, vector<8x128xf32>,
      %cst_102 = arith.constant 0.000000e+00 : f32
      %333 = vector.broadcast %cst_102 : f32 to vector<8x128xf32>
      %c0_103 = arith.constant 0 : index
      %c0_104 = arith.constant 0 : index
      %334 = vector.load %arg6[%c0_103, %c0_104] : memref<8x128xf32, #tpu.memory_space<vmem>>, vector<8x128xf32>
      tpu.vector_store %arg6[%c0_103, %c0_104], %333 {strides = array<i32>} : memref<8x128xf32, #tpu.memory_space<vmem>>, vector<8x128xf32>,
    } else {
    }
    %c8_i32 = arith.constant 8 : i32
    %3 = arith.muli %arg0, %c8_i32 : i32
    %c0 = arith.constant 0 : index
    %c0_1 = arith.constant 0 : index
    %4 = vector.load %arg5[%c0, %c0_1] : memref<8x128xf32, #tpu.memory_space<vmem>>, vector<8x128xf32>
    %c0_2 = arith.constant 0 : index
    %c0_3 = arith.constant 0 : index
    %5 = vector.load %arg6[%c0_2, %c0_3] : memref<8x128xf32, #tpu.memory_space<vmem>>, vector<8x128xf32>
    %c0_i32_4 = arith.constant 0 : i32
    %6 = arith.index_cast %c0_i32_4 : i32 to index
    %c0_5 = arith.constant 0 : index
    %c0_6 = arith.constant 0 : index
    %7 = vector.load %arg1[%6, %c0_5, %c0_6] : memref<8x8x512xf32, #tpu.memory_space<vmem>>, vector<1x8x512xf32>
    %8 = vector.shape_cast %7 : vector<1x8x512xf32> to vector<8x512xf32>
    %9 = arith.truncf %4 : vector<8x128xf32> to vector<8x128xbf16>
    %c0_7 = arith.constant 0 : index
    %c0_8 = arith.constant 0 : index
    %10 = vector.load %arg2[%c0_7, %c0_8] : memref<128x512xbf16, #tpu.memory_space<vmem>>, vector<128x512xbf16>
    %cst = arith.constant dense<0.000000e+00> : vector<8x512xf32>
    %11 = tpu.matmul %9, %10, %cst {dimension_numbers = #tpu.dot_dimension_numbers<[1], [0], [0], [1], [0, 0, 1, 1], [], []>} : vector<8x128xbf16>, vector<128x512xbf16>, vector<8x512xf32> -> vector<8x512xf32>
    %12 = arith.addf %8, %11 : vector<8x512xf32>
    %13 = vector.extract_strided_slice %12 {offsets = [0, 0], sizes = [8, 128], strides = [1, 1]} : vector<8x512xf32> to vector<8x128xf32>
    %14 = arith.negf %13 : vector<8x128xf32>
    %15 = math.exp %14 : vector<8x128xf32>
    %cst_9 = arith.constant 1.000000e+00 : f32
    %16 = vector.broadcast %cst_9 : f32 to vector<8x128xf32>
    %17 = arith.addf %16, %15 : vector<8x128xf32>
    %18 = arith.divf %16, %17 : vector<8x128xf32>
    %19 = vector.extract_strided_slice %12 {offsets = [0, 128], sizes = [8, 128], strides = [1, 1]} : vector<8x512xf32> to vector<8x128xf32>
    %20 = arith.negf %19 : vector<8x128xf32>
    %21 = math.exp %20 : vector<8x128xf32>
    %cst_10 = arith.constant 1.000000e+00 : f32
    %22 = vector.broadcast %cst_10 : f32 to vector<8x128xf32>
    %23 = arith.addf %22, %21 : vector<8x128xf32>
    %24 = arith.divf %22, %23 : vector<8x128xf32>
    %25 = vector.extract_strided_slice %12 {offsets = [0, 256], sizes = [8, 128], strides = [1, 1]} : vector<8x512xf32> to vector<8x128xf32>
    %26 = math.tanh %25 : vector<8x128xf32>
    %27 = vector.extract_strided_slice %12 {offsets = [0, 384], sizes = [8, 128], strides = [1, 1]} : vector<8x512xf32> to vector<8x128xf32>
    %28 = arith.negf %27 : vector<8x128xf32>
    %29 = math.exp %28 : vector<8x128xf32>
    %cst_11 = arith.constant 1.000000e+00 : f32
    %30 = vector.broadcast %cst_11 : f32 to vector<8x128xf32>
    %31 = arith.addf %30, %29 : vector<8x128xf32>
    %32 = arith.divf %30, %31 : vector<8x128xf32>
    %33 = arith.mulf %24, %5 : vector<8x128xf32>
    %34 = arith.mulf %18, %26 : vector<8x128xf32>
    %35 = arith.addf %33, %34 : vector<8x128xf32>
    %36 = math.tanh %35 : vector<8x128xf32>
    %37 = arith.mulf %32, %36 : vector<8x128xf32>
    %38 = arith.index_cast %c0_i32_4 : i32 to index
    %c0_12 = arith.constant 0 : index
    %c0_13 = arith.constant 0 : index
    %39 = vector.load %arg3[%38, %c0_12, %c0_13] : memref<8x8x128xf32, #tpu.memory_space<vmem>>, vector<1x8x128xf32>
    %40 = vector.shape_cast %39 : vector<1x8x128xf32> to vector<8x128xf32>
    %41 = vector.shape_cast %37 : vector<8x128xf32> to vector<1x8x128xf32>
    tpu.vector_store %arg3[%38, %c0_12, %c0_13], %41 {strides = array<i32>} : memref<8x8x128xf32, #tpu.memory_space<vmem>>, vector<1x8x128xf32>,
    %42 = arith.addi %3, %c0_i32_4 : i32
    %c8_i32_14 = arith.constant 8 : i32
    %43 = arith.cmpi slt, %42, %c8_i32_14 : i32
    %44 = arith.select %43, %37, %4 : vector<8x128xf32>
    %45 = arith.select %43, %35, %5 : vector<8x128xf32>
    %c1_i32 = arith.constant 1 : i32
    %46 = arith.index_cast %c1_i32 : i32 to index
    %c0_15 = arith.constant 0 : index
    %c0_16 = arith.constant 0 : index
    %47 = vector.load %arg1[%46, %c0_15, %c0_16] : memref<8x8x512xf32, #tpu.memory_space<vmem>>, vector<1x8x512xf32>
    %48 = vector.shape_cast %47 : vector<1x8x512xf32> to vector<8x512xf32>
    %49 = arith.truncf %44 : vector<8x128xf32> to vector<8x128xbf16>
    %c0_17 = arith.constant 0 : index
    %c0_18 = arith.constant 0 : index
    %50 = vector.load %arg2[%c0_17, %c0_18] : memref<128x512xbf16, #tpu.memory_space<vmem>>, vector<128x512xbf16>
    %cst_19 = arith.constant dense<0.000000e+00> : vector<8x512xf32>
    %51 = tpu.matmul %49, %50, %cst_19 {dimension_numbers = #tpu.dot_dimension_numbers<[1], [0], [0], [1], [0, 0, 1, 1], [], []>} : vector<8x128xbf16>, vector<128x512xbf16>, vector<8x512xf32> -> vector<8x512xf32>
    %52 = arith.addf %48, %51 : vector<8x512xf32>
    %53 = vector.extract_strided_slice %52 {offsets = [0, 0], sizes = [8, 128], strides = [1, 1]} : vector<8x512xf32> to vector<8x128xf32>
    %54 = arith.negf %53 : vector<8x128xf32>
    %55 = math.exp %54 : vector<8x128xf32>
    %cst_20 = arith.constant 1.000000e+00 : f32
    %56 = vector.broadcast %cst_20 : f32 to vector<8x128xf32>
    %57 = arith.addf %56, %55 : vector<8x128xf32>
    %58 = arith.divf %56, %57 : vector<8x128xf32>
    %59 = vector.extract_strided_slice %52 {offsets = [0, 128], sizes = [8, 128], strides = [1, 1]} : vector<8x512xf32> to vector<8x128xf32>
    %60 = arith.negf %59 : vector<8x128xf32>
    %61 = math.exp %60 : vector<8x128xf32>
    %cst_21 = arith.constant 1.000000e+00 : f32
    %62 = vector.broadcast %cst_21 : f32 to vector<8x128xf32>
    %63 = arith.addf %62, %61 : vector<8x128xf32>
    %64 = arith.divf %62, %63 : vector<8x128xf32>
    %65 = vector.extract_strided_slice %52 {offsets = [0, 256], sizes = [8, 128], strides = [1, 1]} : vector<8x512xf32> to vector<8x128xf32>
    %66 = math.tanh %65 : vector<8x128xf32>
    %67 = vector.extract_strided_slice %52 {offsets = [0, 384], sizes = [8, 128], strides = [1, 1]} : vector<8x512xf32> to vector<8x128xf32>
    %68 = arith.negf %67 : vector<8x128xf32>
    %69 = math.exp %68 : vector<8x128xf32>
    %cst_22 = arith.constant 1.000000e+00 : f32
    %70 = vector.broadcast %cst_22 : f32 to vector<8x128xf32>
    %71 = arith.addf %70, %69 : vector<8x128xf32>
    %72 = arith.divf %70, %71 : vector<8x128xf32>
    %73 = arith.mulf %64, %45 : vector<8x128xf32>
    %74 = arith.mulf %58, %66 : vector<8x128xf32>
    %75 = arith.addf %73, %74 : vector<8x128xf32>
    %76 = math.tanh %75 : vector<8x128xf32>
    %77 = arith.mulf %72, %76 : vector<8x128xf32>
    %78 = arith.index_cast %c1_i32 : i32 to index
    %c0_23 = arith.constant 0 : index
    %c0_24 = arith.constant 0 : index
    %79 = vector.load %arg3[%78, %c0_23, %c0_24] : memref<8x8x128xf32, #tpu.memory_space<vmem>>, vector<1x8x128xf32>
    %80 = vector.shape_cast %79 : vector<1x8x128xf32> to vector<8x128xf32>
    %81 = vector.shape_cast %77 : vector<8x128xf32> to vector<1x8x128xf32>
    tpu.vector_store %arg3[%78, %c0_23, %c0_24], %81 {strides = array<i32>} : memref<8x8x128xf32, #tpu.memory_space<vmem>>, vector<1x8x128xf32>,
    %82 = arith.addi %3, %c1_i32 : i32
    %c8_i32_25 = arith.constant 8 : i32
    %83 = arith.cmpi slt, %82, %c8_i32_25 : i32
    %84 = arith.select %83, %77, %44 : vector<8x128xf32>
    %85 = arith.select %83, %75, %45 : vector<8x128xf32>
    %c2_i32 = arith.constant 2 : i32
    %86 = arith.index_cast %c2_i32 : i32 to index
    %c0_26 = arith.constant 0 : index
    %c0_27 = arith.constant 0 : index
    %87 = vector.load %arg1[%86, %c0_26, %c0_27] : memref<8x8x512xf32, #tpu.memory_space<vmem>>, vector<1x8x512xf32>
    %88 = vector.shape_cast %87 : vector<1x8x512xf32> to vector<8x512xf32>
    %89 = arith.truncf %84 : vector<8x128xf32> to vector<8x128xbf16>
    %c0_28 = arith.constant 0 : index
    %c0_29 = arith.constant 0 : index
    %90 = vector.load %arg2[%c0_28, %c0_29] : memref<128x512xbf16, #tpu.memory_space<vmem>>, vector<128x512xbf16>
    %cst_30 = arith.constant dense<0.000000e+00> : vector<8x512xf32>
    %91 = tpu.matmul %89, %90, %cst_30 {dimension_numbers = #tpu.dot_dimension_numbers<[1], [0], [0], [1], [0, 0, 1, 1], [], []>} : vector<8x128xbf16>, vector<128x512xbf16>, vector<8x512xf32> -> vector<8x512xf32>
    %92 = arith.addf %88, %91 : vector<8x512xf32>
    %93 = vector.extract_strided_slice %92 {offsets = [0, 0], sizes = [8, 128], strides = [1, 1]} : vector<8x512xf32> to vector<8x128xf32>
    %94 = arith.negf %93 : vector<8x128xf32>
    %95 = math.exp %94 : vector<8x128xf32>
    %cst_31 = arith.constant 1.000000e+00 : f32
    %96 = vector.broadcast %cst_31 : f32 to vector<8x128xf32>
    %97 = arith.addf %96, %95 : vector<8x128xf32>
    %98 = arith.divf %96, %97 : vector<8x128xf32>
    %99 = vector.extract_strided_slice %92 {offsets = [0, 128], sizes = [8, 128], strides = [1, 1]} : vector<8x512xf32> to vector<8x128xf32>
    %100 = arith.negf %99 : vector<8x128xf32>
    %101 = math.exp %100 : vector<8x128xf32>
    %cst_32 = arith.constant 1.000000e+00 : f32
    %102 = vector.broadcast %cst_32 : f32 to vector<8x128xf32>
    %103 = arith.addf %102, %101 : vector<8x128xf32>
    %104 = arith.divf %102, %103 : vector<8x128xf32>
    %105 = vector.extract_strided_slice %92 {offsets = [0, 256], sizes = [8, 128], strides = [1, 1]} : vector<8x512xf32> to vector<8x128xf32>
    %106 = math.tanh %105 : vector<8x128xf32>
    %107 = vector.extract_strided_slice %92 {offsets = [0, 384], sizes = [8, 128], strides = [1, 1]} : vector<8x512xf32> to vector<8x128xf32>
    %108 = arith.negf %107 : vector<8x128xf32>
    %109 = math.exp %108 : vector<8x128xf32>
    %cst_33 = arith.constant 1.000000e+00 : f32
    %110 = vector.broadcast %cst_33 : f32 to vector<8x128xf32>
    %111 = arith.addf %110, %109 : vector<8x128xf32>
    %112 = arith.divf %110, %111 : vector<8x128xf32>
    %113 = arith.mulf %104, %85 : vector<8x128xf32>
    %114 = arith.mulf %98, %106 : vector<8x128xf32>
    %115 = arith.addf %113, %114 : vector<8x128xf32>
    %116 = math.tanh %115 : vector<8x128xf32>
    %117 = arith.mulf %112, %116 : vector<8x128xf32>
    %118 = arith.index_cast %c2_i32 : i32 to index
    %c0_34 = arith.constant 0 : index
    %c0_35 = arith.constant 0 : index
    %119 = vector.load %arg3[%118, %c0_34, %c0_35] : memref<8x8x128xf32, #tpu.memory_space<vmem>>, vector<1x8x128xf32>
    %120 = vector.shape_cast %119 : vector<1x8x128xf32> to vector<8x128xf32>
    %121 = vector.shape_cast %117 : vector<8x128xf32> to vector<1x8x128xf32>
    tpu.vector_store %arg3[%118, %c0_34, %c0_35], %121 {strides = array<i32>} : memref<8x8x128xf32, #tpu.memory_space<vmem>>, vector<1x8x128xf32>,
    %122 = arith.addi %3, %c2_i32 : i32
    %c8_i32_36 = arith.constant 8 : i32
    %123 = arith.cmpi slt, %122, %c8_i32_36 : i32
    %124 = arith.select %123, %117, %84 : vector<8x128xf32>
    %125 = arith.select %123, %115, %85 : vector<8x128xf32>
    %c3_i32 = arith.constant 3 : i32
    %126 = arith.index_cast %c3_i32 : i32 to index
    %c0_37 = arith.constant 0 : index
    %c0_38 = arith.constant 0 : index
    %127 = vector.load %arg1[%126, %c0_37, %c0_38] : memref<8x8x512xf32, #tpu.memory_space<vmem>>, vector<1x8x512xf32>
    %128 = vector.shape_cast %127 : vector<1x8x512xf32> to vector<8x512xf32>
    %129 = arith.truncf %124 : vector<8x128xf32> to vector<8x128xbf16>
    %c0_39 = arith.constant 0 : index
    %c0_40 = arith.constant 0 : index
    %130 = vector.load %arg2[%c0_39, %c0_40] : memref<128x512xbf16, #tpu.memory_space<vmem>>, vector<128x512xbf16>
    %cst_41 = arith.constant dense<0.000000e+00> : vector<8x512xf32>
    %131 = tpu.matmul %129, %130, %cst_41 {dimension_numbers = #tpu.dot_dimension_numbers<[1], [0], [0], [1], [0, 0, 1, 1], [], []>} : vector<8x128xbf16>, vector<128x512xbf16>, vector<8x512xf32> -> vector<8x512xf32>
    %132 = arith.addf %128, %131 : vector<8x512xf32>
    %133 = vector.extract_strided_slice %132 {offsets = [0, 0], sizes = [8, 128], strides = [1, 1]} : vector<8x512xf32> to vector<8x128xf32>
    %134 = arith.negf %133 : vector<8x128xf32>
    %135 = math.exp %134 : vector<8x128xf32>
    %cst_42 = arith.constant 1.000000e+00 : f32
    %136 = vector.broadcast %cst_42 : f32 to vector<8x128xf32>
    %137 = arith.addf %136, %135 : vector<8x128xf32>
    %138 = arith.divf %136, %137 : vector<8x128xf32>
    %139 = vector.extract_strided_slice %132 {offsets = [0, 128], sizes = [8, 128], strides = [1, 1]} : vector<8x512xf32> to vector<8x128xf32>
    %140 = arith.negf %139 : vector<8x128xf32>
    %141 = math.exp %140 : vector<8x128xf32>
    %cst_43 = arith.constant 1.000000e+00 : f32
    %142 = vector.broadcast %cst_43 : f32 to vector<8x128xf32>
    %143 = arith.addf %142, %141 : vector<8x128xf32>
    %144 = arith.divf %142, %143 : vector<8x128xf32>
    %145 = vector.extract_strided_slice %132 {offsets = [0, 256], sizes = [8, 128], strides = [1, 1]} : vector<8x512xf32> to vector<8x128xf32>
    %146 = math.tanh %145 : vector<8x128xf32>
    %147 = vector.extract_strided_slice %132 {offsets = [0, 384], sizes = [8, 128], strides = [1, 1]} : vector<8x512xf32> to vector<8x128xf32>
    %148 = arith.negf %147 : vector<8x128xf32>
    %149 = math.exp %148 : vector<8x128xf32>
    %cst_44 = arith.constant 1.000000e+00 : f32
    %150 = vector.broadcast %cst_44 : f32 to vector<8x128xf32>
    %151 = arith.addf %150, %149 : vector<8x128xf32>
    %152 = arith.divf %150, %151 : vector<8x128xf32>
    %153 = arith.mulf %144, %125 : vector<8x128xf32>
    %154 = arith.mulf %138, %146 : vector<8x128xf32>
    %155 = arith.addf %153, %154 : vector<8x128xf32>
    %156 = math.tanh %155 : vector<8x128xf32>
    %157 = arith.mulf %152, %156 : vector<8x128xf32>
    %158 = arith.index_cast %c3_i32 : i32 to index
    %c0_45 = arith.constant 0 : index
    %c0_46 = arith.constant 0 : index
    %159 = vector.load %arg3[%158, %c0_45, %c0_46] : memref<8x8x128xf32, #tpu.memory_space<vmem>>, vector<1x8x128xf32>
    %160 = vector.shape_cast %159 : vector<1x8x128xf32> to vector<8x128xf32>
    %161 = vector.shape_cast %157 : vector<8x128xf32> to vector<1x8x128xf32>
    tpu.vector_store %arg3[%158, %c0_45, %c0_46], %161 {strides = array<i32>} : memref<8x8x128xf32, #tpu.memory_space<vmem>>, vector<1x8x128xf32>,
    %162 = arith.addi %3, %c3_i32 : i32
    %c8_i32_47 = arith.constant 8 : i32
    %163 = arith.cmpi slt, %162, %c8_i32_47 : i32
    %164 = arith.select %163, %157, %124 : vector<8x128xf32>
    %165 = arith.select %163, %155, %125 : vector<8x128xf32>
    %c4_i32 = arith.constant 4 : i32
    %166 = arith.index_cast %c4_i32 : i32 to index
    %c0_48 = arith.constant 0 : index
    %c0_49 = arith.constant 0 : index
    %167 = vector.load %arg1[%166, %c0_48, %c0_49] : memref<8x8x512xf32, #tpu.memory_space<vmem>>, vector<1x8x512xf32>
    %168 = vector.shape_cast %167 : vector<1x8x512xf32> to vector<8x512xf32>
    %169 = arith.truncf %164 : vector<8x128xf32> to vector<8x128xbf16>
    %c0_50 = arith.constant 0 : index
    %c0_51 = arith.constant 0 : index
    %170 = vector.load %arg2[%c0_50, %c0_51] : memref<128x512xbf16, #tpu.memory_space<vmem>>, vector<128x512xbf16>
    %cst_52 = arith.constant dense<0.000000e+00> : vector<8x512xf32>
    %171 = tpu.matmul %169, %170, %cst_52 {dimension_numbers = #tpu.dot_dimension_numbers<[1], [0], [0], [1], [0, 0, 1, 1], [], []>} : vector<8x128xbf16>, vector<128x512xbf16>, vector<8x512xf32> -> vector<8x512xf32>
    %172 = arith.addf %168, %171 : vector<8x512xf32>
    %173 = vector.extract_strided_slice %172 {offsets = [0, 0], sizes = [8, 128], strides = [1, 1]} : vector<8x512xf32> to vector<8x128xf32>
    %174 = arith.negf %173 : vector<8x128xf32>
    %175 = math.exp %174 : vector<8x128xf32>
    %cst_53 = arith.constant 1.000000e+00 : f32
    %176 = vector.broadcast %cst_53 : f32 to vector<8x128xf32>
    %177 = arith.addf %176, %175 : vector<8x128xf32>
    %178 = arith.divf %176, %177 : vector<8x128xf32>
    %179 = vector.extract_strided_slice %172 {offsets = [0, 128], sizes = [8, 128], strides = [1, 1]} : vector<8x512xf32> to vector<8x128xf32>
    %180 = arith.negf %179 : vector<8x128xf32>
    %181 = math.exp %180 : vector<8x128xf32>
    %cst_54 = arith.constant 1.000000e+00 : f32
    %182 = vector.broadcast %cst_54 : f32 to vector<8x128xf32>
    %183 = arith.addf %182, %181 : vector<8x128xf32>
    %184 = arith.divf %182, %183 : vector<8x128xf32>
    %185 = vector.extract_strided_slice %172 {offsets = [0, 256], sizes = [8, 128], strides = [1, 1]} : vector<8x512xf32> to vector<8x128xf32>
    %186 = math.tanh %185 : vector<8x128xf32>
    %187 = vector.extract_strided_slice %172 {offsets = [0, 384], sizes = [8, 128], strides = [1, 1]} : vector<8x512xf32> to vector<8x128xf32>
    %188 = arith.negf %187 : vector<8x128xf32>
    %189 = math.exp %188 : vector<8x128xf32>
    %cst_55 = arith.constant 1.000000e+00 : f32
    %190 = vector.broadcast %cst_55 : f32 to vector<8x128xf32>
    %191 = arith.addf %190, %189 : vector<8x128xf32>
    %192 = arith.divf %190, %191 : vector<8x128xf32>
    %193 = arith.mulf %184, %165 : vector<8x128xf32>
    %194 = arith.mulf %178, %186 : vector<8x128xf32>
    %195 = arith.addf %193, %194 : vector<8x128xf32>
    %196 = math.tanh %195 : vector<8x128xf32>
    %197 = arith.mulf %192, %196 : vector<8x128xf32>
    %198 = arith.index_cast %c4_i32 : i32 to index
    %c0_56 = arith.constant 0 : index
    %c0_57 = arith.constant 0 : index
    %199 = vector.load %arg3[%198, %c0_56, %c0_57] : memref<8x8x128xf32, #tpu.memory_space<vmem>>, vector<1x8x128xf32>
    %200 = vector.shape_cast %199 : vector<1x8x128xf32> to vector<8x128xf32>
    %201 = vector.shape_cast %197 : vector<8x128xf32> to vector<1x8x128xf32>
    tpu.vector_store %arg3[%198, %c0_56, %c0_57], %201 {strides = array<i32>} : memref<8x8x128xf32, #tpu.memory_space<vmem>>, vector<1x8x128xf32>,
    %202 = arith.addi %3, %c4_i32 : i32
    %c8_i32_58 = arith.constant 8 : i32
    %203 = arith.cmpi slt, %202, %c8_i32_58 : i32
    %204 = arith.select %203, %197, %164 : vector<8x128xf32>
    %205 = arith.select %203, %195, %165 : vector<8x128xf32>
    %c5_i32 = arith.constant 5 : i32
    %206 = arith.index_cast %c5_i32 : i32 to index
    %c0_59 = arith.constant 0 : index
    %c0_60 = arith.constant 0 : index
    %207 = vector.load %arg1[%206, %c0_59, %c0_60] : memref<8x8x512xf32, #tpu.memory_space<vmem>>, vector<1x8x512xf32>
    %208 = vector.shape_cast %207 : vector<1x8x512xf32> to vector<8x512xf32>
    %209 = arith.truncf %204 : vector<8x128xf32> to vector<8x128xbf16>
    %c0_61 = arith.constant 0 : index
    %c0_62 = arith.constant 0 : index
    %210 = vector.load %arg2[%c0_61, %c0_62] : memref<128x512xbf16, #tpu.memory_space<vmem>>, vector<128x512xbf16>
    %cst_63 = arith.constant dense<0.000000e+00> : vector<8x512xf32>
    %211 = tpu.matmul %209, %210, %cst_63 {dimension_numbers = #tpu.dot_dimension_numbers<[1], [0], [0], [1], [0, 0, 1, 1], [], []>} : vector<8x128xbf16>, vector<128x512xbf16>, vector<8x512xf32> -> vector<8x512xf32>
    %212 = arith.addf %208, %211 : vector<8x512xf32>
    %213 = vector.extract_strided_slice %212 {offsets = [0, 0], sizes = [8, 128], strides = [1, 1]} : vector<8x512xf32> to vector<8x128xf32>
    %214 = arith.negf %213 : vector<8x128xf32>
    %215 = math.exp %214 : vector<8x128xf32>
    %cst_64 = arith.constant 1.000000e+00 : f32
    %216 = vector.broadcast %cst_64 : f32 to vector<8x128xf32>
    %217 = arith.addf %216, %215 : vector<8x128xf32>
    %218 = arith.divf %216, %217 : vector<8x128xf32>
    %219 = vector.extract_strided_slice %212 {offsets = [0, 128], sizes = [8, 128], strides = [1, 1]} : vector<8x512xf32> to vector<8x128xf32>
    %220 = arith.negf %219 : vector<8x128xf32>
    %221 = math.exp %220 : vector<8x128xf32>
    %cst_65 = arith.constant 1.000000e+00 : f32
    %222 = vector.broadcast %cst_65 : f32 to vector<8x128xf32>
    %223 = arith.addf %222, %221 : vector<8x128xf32>
    %224 = arith.divf %222, %223 : vector<8x128xf32>
    %225 = vector.extract_strided_slice %212 {offsets = [0, 256], sizes = [8, 128], strides = [1, 1]} : vector<8x512xf32> to vector<8x128xf32>
    %226 = math.tanh %225 : vector<8x128xf32>
    %227 = vector.extract_strided_slice %212 {offsets = [0, 384], sizes = [8, 128], strides = [1, 1]} : vector<8x512xf32> to vector<8x128xf32>
    %228 = arith.negf %227 : vector<8x128xf32>
    %229 = math.exp %228 : vector<8x128xf32>
    %cst_66 = arith.constant 1.000000e+00 : f32
    %230 = vector.broadcast %cst_66 : f32 to vector<8x128xf32>
    %231 = arith.addf %230, %229 : vector<8x128xf32>
    %232 = arith.divf %230, %231 : vector<8x128xf32>
    %233 = arith.mulf %224, %205 : vector<8x128xf32>
    %234 = arith.mulf %218, %226 : vector<8x128xf32>
    %235 = arith.addf %233, %234 : vector<8x128xf32>
    %236 = math.tanh %235 : vector<8x128xf32>
    %237 = arith.mulf %232, %236 : vector<8x128xf32>
    %238 = arith.index_cast %c5_i32 : i32 to index
    %c0_67 = arith.constant 0 : index
    %c0_68 = arith.constant 0 : index
    %239 = vector.load %arg3[%238, %c0_67, %c0_68] : memref<8x8x128xf32, #tpu.memory_space<vmem>>, vector<1x8x128xf32>
    %240 = vector.shape_cast %239 : vector<1x8x128xf32> to vector<8x128xf32>
    %241 = vector.shape_cast %237 : vector<8x128xf32> to vector<1x8x128xf32>
    tpu.vector_store %arg3[%238, %c0_67, %c0_68], %241 {strides = array<i32>} : memref<8x8x128xf32, #tpu.memory_space<vmem>>, vector<1x8x128xf32>,
    %242 = arith.addi %3, %c5_i32 : i32
    %c8_i32_69 = arith.constant 8 : i32
    %243 = arith.cmpi slt, %242, %c8_i32_69 : i32
    %244 = arith.select %243, %237, %204 : vector<8x128xf32>
    %245 = arith.select %243, %235, %205 : vector<8x128xf32>
    %c6_i32 = arith.constant 6 : i32
    %246 = arith.index_cast %c6_i32 : i32 to index
    %c0_70 = arith.constant 0 : index
    %c0_71 = arith.constant 0 : index
    %247 = vector.load %arg1[%246, %c0_70, %c0_71] : memref<8x8x512xf32, #tpu.memory_space<vmem>>, vector<1x8x512xf32>
    %248 = vector.shape_cast %247 : vector<1x8x512xf32> to vector<8x512xf32>
    %249 = arith.truncf %244 : vector<8x128xf32> to vector<8x128xbf16>
    %c0_72 = arith.constant 0 : index
    %c0_73 = arith.constant 0 : index
    %250 = vector.load %arg2[%c0_72, %c0_73] : memref<128x512xbf16, #tpu.memory_space<vmem>>, vector<128x512xbf16>
    %cst_74 = arith.constant dense<0.000000e+00> : vector<8x512xf32>
    %251 = tpu.matmul %249, %250, %cst_74 {dimension_numbers = #tpu.dot_dimension_numbers<[1], [0], [0], [1], [0, 0, 1, 1], [], []>} : vector<8x128xbf16>, vector<128x512xbf16>, vector<8x512xf32> -> vector<8x512xf32>
    %252 = arith.addf %248, %251 : vector<8x512xf32>
    %253 = vector.extract_strided_slice %252 {offsets = [0, 0], sizes = [8, 128], strides = [1, 1]} : vector<8x512xf32> to vector<8x128xf32>
    %254 = arith.negf %253 : vector<8x128xf32>
    %255 = math.exp %254 : vector<8x128xf32>
    %cst_75 = arith.constant 1.000000e+00 : f32
    %256 = vector.broadcast %cst_75 : f32 to vector<8x128xf32>
    %257 = arith.addf %256, %255 : vector<8x128xf32>
    %258 = arith.divf %256, %257 : vector<8x128xf32>
    %259 = vector.extract_strided_slice %252 {offsets = [0, 128], sizes = [8, 128], strides = [1, 1]} : vector<8x512xf32> to vector<8x128xf32>
    %260 = arith.negf %259 : vector<8x128xf32>
    %261 = math.exp %260 : vector<8x128xf32>
    %cst_76 = arith.constant 1.000000e+00 : f32
    %262 = vector.broadcast %cst_76 : f32 to vector<8x128xf32>
    %263 = arith.addf %262, %261 : vector<8x128xf32>
    %264 = arith.divf %262, %263 : vector<8x128xf32>
    %265 = vector.extract_strided_slice %252 {offsets = [0, 256], sizes = [8, 128], strides = [1, 1]} : vector<8x512xf32> to vector<8x128xf32>
    %266 = math.tanh %265 : vector<8x128xf32>
    %267 = vector.extract_strided_slice %252 {offsets = [0, 384], sizes = [8, 128], strides = [1, 1]} : vector<8x512xf32> to vector<8x128xf32>
    %268 = arith.negf %267 : vector<8x128xf32>
    %269 = math.exp %268 : vector<8x128xf32>
    %cst_77 = arith.constant 1.000000e+00 : f32
    %270 = vector.broadcast %cst_77 : f32 to vector<8x128xf32>
    %271 = arith.addf %270, %269 : vector<8x128xf32>
    %272 = arith.divf %270, %271 : vector<8x128xf32>
    %273 = arith.mulf %264, %245 : vector<8x128xf32>
    %274 = arith.mulf %258, %266 : vector<8x128xf32>
    %275 = arith.addf %273, %274 : vector<8x128xf32>
    %276 = math.tanh %275 : vector<8x128xf32>
    %277 = arith.mulf %272, %276 : vector<8x128xf32>
    %278 = arith.index_cast %c6_i32 : i32 to index
    %c0_78 = arith.constant 0 : index
    %c0_79 = arith.constant 0 : index
    %279 = vector.load %arg3[%278, %c0_78, %c0_79] : memref<8x8x128xf32, #tpu.memory_space<vmem>>, vector<1x8x128xf32>
    %280 = vector.shape_cast %279 : vector<1x8x128xf32> to vector<8x128xf32>
    %281 = vector.shape_cast %277 : vector<8x128xf32> to vector<1x8x128xf32>
    tpu.vector_store %arg3[%278, %c0_78, %c0_79], %281 {strides = array<i32>} : memref<8x8x128xf32, #tpu.memory_space<vmem>>, vector<1x8x128xf32>,
    %282 = arith.addi %3, %c6_i32 : i32
    %c8_i32_80 = arith.constant 8 : i32
    %283 = arith.cmpi slt, %282, %c8_i32_80 : i32
    %284 = arith.select %283, %277, %244 : vector<8x128xf32>
    %285 = arith.select %283, %275, %245 : vector<8x128xf32>
    %c7_i32 = arith.constant 7 : i32
    %286 = arith.index_cast %c7_i32 : i32 to index
    %c0_81 = arith.constant 0 : index
    %c0_82 = arith.constant 0 : index
    %287 = vector.load %arg1[%286, %c0_81, %c0_82] : memref<8x8x512xf32, #tpu.memory_space<vmem>>, vector<1x8x512xf32>
    %288 = vector.shape_cast %287 : vector<1x8x512xf32> to vector<8x512xf32>
    %289 = arith.truncf %284 : vector<8x128xf32> to vector<8x128xbf16>
    %c0_83 = arith.constant 0 : index
    %c0_84 = arith.constant 0 : index
    %290 = vector.load %arg2[%c0_83, %c0_84] : memref<128x512xbf16, #tpu.memory_space<vmem>>, vector<128x512xbf16>
    %cst_85 = arith.constant dense<0.000000e+00> : vector<8x512xf32>
    %291 = tpu.matmul %289, %290, %cst_85 {dimension_numbers = #tpu.dot_dimension_numbers<[1], [0], [0], [1], [0, 0, 1, 1], [], []>} : vector<8x128xbf16>, vector<128x512xbf16>, vector<8x512xf32> -> vector<8x512xf32>
    %292 = arith.addf %288, %291 : vector<8x512xf32>
    %293 = vector.extract_strided_slice %292 {offsets = [0, 0], sizes = [8, 128], strides = [1, 1]} : vector<8x512xf32> to vector<8x128xf32>
    %294 = arith.negf %293 : vector<8x128xf32>
    %295 = math.exp %294 : vector<8x128xf32>
    %cst_86 = arith.constant 1.000000e+00 : f32
    %296 = vector.broadcast %cst_86 : f32 to vector<8x128xf32>
    %297 = arith.addf %296, %295 : vector<8x128xf32>
    %298 = arith.divf %296, %297 : vector<8x128xf32>
    %299 = vector.extract_strided_slice %292 {offsets = [0, 128], sizes = [8, 128], strides = [1, 1]} : vector<8x512xf32> to vector<8x128xf32>
    %300 = arith.negf %299 : vector<8x128xf32>
    %301 = math.exp %300 : vector<8x128xf32>
    %cst_87 = arith.constant 1.000000e+00 : f32
    %302 = vector.broadcast %cst_87 : f32 to vector<8x128xf32>
    %303 = arith.addf %302, %301 : vector<8x128xf32>
    %304 = arith.divf %302, %303 : vector<8x128xf32>
    %305 = vector.extract_strided_slice %292 {offsets = [0, 256], sizes = [8, 128], strides = [1, 1]} : vector<8x512xf32> to vector<8x128xf32>
    %306 = math.tanh %305 : vector<8x128xf32>
    %307 = vector.extract_strided_slice %292 {offsets = [0, 384], sizes = [8, 128], strides = [1, 1]} : vector<8x512xf32> to vector<8x128xf32>
    %308 = arith.negf %307 : vector<8x128xf32>
    %309 = math.exp %308 : vector<8x128xf32>
    %cst_88 = arith.constant 1.000000e+00 : f32
    %310 = vector.broadcast %cst_88 : f32 to vector<8x128xf32>
    %311 = arith.addf %310, %309 : vector<8x128xf32>
    %312 = arith.divf %310, %311 : vector<8x128xf32>
    %313 = arith.mulf %304, %285 : vector<8x128xf32>
    %314 = arith.mulf %298, %306 : vector<8x128xf32>
    %315 = arith.addf %313, %314 : vector<8x128xf32>
    %316 = math.tanh %315 : vector<8x128xf32>
    %317 = arith.mulf %312, %316 : vector<8x128xf32>
    %318 = arith.index_cast %c7_i32 : i32 to index
    %c0_89 = arith.constant 0 : index
    %c0_90 = arith.constant 0 : index
    %319 = vector.load %arg3[%318, %c0_89, %c0_90] : memref<8x8x128xf32, #tpu.memory_space<vmem>>, vector<1x8x128xf32>
    %320 = vector.shape_cast %319 : vector<1x8x128xf32> to vector<8x128xf32>
    %321 = vector.shape_cast %317 : vector<8x128xf32> to vector<1x8x128xf32>
    tpu.vector_store %arg3[%318, %c0_89, %c0_90], %321 {strides = array<i32>} : memref<8x8x128xf32, #tpu.memory_space<vmem>>, vector<1x8x128xf32>,
    %322 = arith.addi %3, %c7_i32 : i32
    %c8_i32_91 = arith.constant 8 : i32
    %323 = arith.cmpi slt, %322, %c8_i32_91 : i32
    %324 = arith.select %323, %317, %284 : vector<8x128xf32>
    %325 = arith.select %323, %315, %285 : vector<8x128xf32>
    %c8_i32_92 = arith.constant 8 : i32
    %c0_93 = arith.constant 0 : index
    %c0_94 = arith.constant 0 : index
    %326 = vector.load %arg5[%c0_93, %c0_94] : memref<8x128xf32, #tpu.memory_space<vmem>>, vector<8x128xf32>
    tpu.vector_store %arg5[%c0_93, %c0_94], %324 {strides = array<i32>} : memref<8x128xf32, #tpu.memory_space<vmem>>, vector<8x128xf32>,
    %c0_95 = arith.constant 0 : index
    %c0_96 = arith.constant 0 : index
    %327 = vector.load %arg6[%c0_95, %c0_96] : memref<8x128xf32, #tpu.memory_space<vmem>>, vector<8x128xf32>
    tpu.vector_store %arg6[%c0_95, %c0_96], %325 {strides = array<i32>} : memref<8x128xf32, #tpu.memory_space<vmem>>, vector<8x128xf32>,
    %c0_i32_97 = arith.constant 0 : i32
    %328 = arith.cmpi eq, %arg0, %c0_i32_97 : i32
    %329 = arith.extui %328 : i1 to i32
    %c0_i32_98 = arith.constant 0 : i32
    %330 = arith.cmpi ne, %329, %c0_i32_98 : i32
    scf.if %330 {
      %c0_99 = arith.constant 0 : index
      %c0_100 = arith.constant 0 : index
      %331 = vector.load %arg6[%c0_99, %c0_100] : memref<8x128xf32, #tpu.memory_space<vmem>>, vector<8x128xf32>
      %c0_101 = arith.constant 0 : index
      %c0_102 = arith.constant 0 : index
      %c0_103 = arith.constant 0 : index
      %332 = vector.load %arg4[%c0_101, %c0_102, %c0_103] : memref<1x8x128xf32, #tpu.memory_space<vmem>>, vector<1x8x128xf32>
      %333 = vector.shape_cast %332 : vector<1x8x128xf32> to vector<8x128xf32>
      %334 = vector.shape_cast %331 : vector<8x128xf32> to vector<1x8x128xf32>
      tpu.vector_store %arg4[%c0_101, %c0_102, %c0_103], %334 {strides = array<i32>} : memref<1x8x128xf32, #tpu.memory_space<vmem>>, vector<1x8x128xf32>,
    } else {
    }
    return
  }
  func.func @transform_0(%arg0: i32) -> (i32, i32, i32) {
    %c0_i32 = arith.constant 0 : i32
    %c0_i32_0 = arith.constant 0 : i32
    %c0_i32_1 = arith.constant 0 : i32
    return %arg0, %c0_i32, %c0_i32_0 : i32, i32, i32
  }
  func.func @transform_1(%arg0: i32) -> (i32, i32) {
    %c0_i32 = arith.constant 0 : i32
    %c0_i32_0 = arith.constant 0 : i32
    %c0_i32_1 = arith.constant 0 : i32
    return %c0_i32, %c0_i32_0 : i32, i32
  }
  func.func @transform_2(%arg0: i32) -> (i32, i32, i32) {
    %c0_i32 = arith.constant 0 : i32
    %c0_i32_0 = arith.constant 0 : i32
    %c0_i32_1 = arith.constant 0 : i32
    return %arg0, %c0_i32, %c0_i32_0 : i32, i32, i32
  }
  func.func @transform_3(%arg0: i32) -> (i32, i32, i32) {
    %c0_i32 = arith.constant 0 : i32
    %c0_i32_0 = arith.constant 0 : i32
    %c0_i32_1 = arith.constant 0 : i32
    %c0_i32_2 = arith.constant 0 : i32
    return %c0_i32, %c0_i32_0, %c0_i32_1 : i32, i32, i32
  }
}

</mosaic_0001>

<llo_original>
// kernel: encoder_forward.1
$region0: #{encoder_forward.1}
  #allocation0 [shape = 'u32[]', space=smem, size = 0x4, offset = 0x4, fixed_abs, tag = 'smem constant byte address 0x4 - core index']
  #allocation1 [shape = 'u32[144,128]{1,0:T(1,128)}', space=vmem, size = 0x12000, scoped, tag = 'internal scratch']
  #allocation2 [shape = 'f32[8,128]{1,0:T(8,128)}', space=vmem, size = 0x1000, scoped, tag = 'scratch operand']
  #allocation3 [shape = 'f32[8,128]{1,0:T(8,128)}', space=vmem, size = 0x1000, scoped, tag = 'scratch operand']
  %s0 = inlined_call_operand.vmem [shape: f32[8,8,512], index: 0, kind: input, shape index: {}]
  %s1 = inlined_call_operand.vmem [shape: bf16[128,512], index: 1, kind: input, shape index: {}]
  %s2 = inlined_call_operand.vmem [shape: f32[8,8,128], index: 2, kind: output, shape index: {0}]
  %s3 = inlined_call_operand.vmem [shape: f32[1,8,128], index: 3, kind: output, shape index: {1}]
  %4 = xla_tuple %s2, %s3
  %s5 = sld [smem:[#allocation0]]
  $region34: #{encoder_forward.1} parent=0
    _
  %s7 = ssub.s32 1, %s5
  %s8 = scalar_select 0, %s7, %s5
  // Predicated region
  $region2: #{encoder_forward.1} parent=0 // pred_check
    _
  $region3: #{encoder_forward.1} parent=0 // pred_check_branch
    %10 = sbr.rel (0) target = $region5
  $region4: #{encoder_forward.1} parent=0 // pred_region
    _
  $region5: #{encoder_forward.1} parent=0 // pred_fallthru
    _
  // Predicated region
  $region6: #{encoder_forward.1} parent=0 // pred_check
    _
  $region7: #{encoder_forward.1} parent=0 // pred_check_branch
    %12 = sbr.rel (0) target = $region9
  $region8: #{encoder_forward.1} parent=0 // pred_region
    _
  $region9: #{encoder_forward.1} parent=0 // pred_fallthru
    _
  %p14 = scmp.eq.s32.totalorder 0, 0
  // Predicated region
  $region10: #{encoder_forward.1} parent=0 // pred_check
    %p15 = pneg %p14
  $region11: #{encoder_forward.1} parent=0 // pred_check_branch
    %17 = sbr.rel (%p15) target = $region13
  $region12: #{encoder_forward.1} parent=0 // pred_region
    %18 = vst [vmem:[#allocation2] sm:$0xff] 0.0
    %19 = vst [vmem:[#allocation3] sm:$0xff] 0.0
  $region13: #{encoder_forward.1} parent=0 // pred_fallthru
    _
  %s20 = smul.u32 0, 8
  %v21 = vld [vmem:[#allocation2] sm:$0xff]
  %v22 = vld [vmem:[#allocation3] sm:$0xff]
  %v23 = vld [vmem:[%s0] sm:$0xff]
  %v24 = vld [vmem:[%s0 + $0x8] sm:$0xff]
  %v25 = vld [vmem:[%s0 + $0x10] sm:$0xff]
  %v26 = vld [vmem:[%s0 + $0x18] sm:$0xff]
  %v27 = vpack.c.bf16 %v21, %v21
  %v28 = vld [vmem:[%s1] sm:$0xff]
  %v29 = vld [vmem:[%s1 + $0x8] sm:$0xff]
  %v30 = vld [vmem:[%s1 + $0x10] sm:$0xff]
  %v31 = vld [vmem:[%s1 + $0x18] sm:$0xff]
  %v32 = vld [vmem:[%s1 + $0x20] sm:$0xff]
  %v33 = vld [vmem:[%s1 + $0x28] sm:$0xff]
  %v34 = vld [vmem:[%s1 + $0x30] sm:$0xff]
  %v35 = vld [vmem:[%s1 + $0x38] sm:$0xff]
  %v36 = vld [vmem:[%s1 + $0x40] sm:$0xff]
  %v37 = vld [vmem:[%s1 + $0x48] sm:$0xff]
  %v38 = vld [vmem:[%s1 + $0x50] sm:$0xff]
  %v39 = vld [vmem:[%s1 + $0x58] sm:$0xff]
  %v40 = vld [vmem:[%s1 + $0x60] sm:$0xff]
  %v41 = vld [vmem:[%s1 + $0x68] sm:$0xff]
  %v42 = vld [vmem:[%s1 + $0x70] sm:$0xff]
  %v43 = vld [vmem:[%s1 + $0x78] sm:$0xff]
  %v44 = vld [vmem:[%s1 + $0x80] sm:$0xff]
  %v45 = vld [vmem:[%s1 + $0x88] sm:$0xff]
  %v46 = vld [vmem:[%s1 + $0x90] sm:$0xff]
  %v47 = vld [vmem:[%s1 + $0x98] sm:$0xff]
  %v48 = vld [vmem:[%s1 + $0xa0] sm:$0xff]
  %v49 = vld [vmem:[%s1 + $0xa8] sm:$0xff]
  %v50 = vld [vmem:[%s1 + $0xb0] sm:$0xff]
  %v51 = vld [vmem:[%s1 + $0xb8] sm:$0xff]
  %v52 = vld [vmem:[%s1 + $0xc0] sm:$0xff]
  %v53 = vld [vmem:[%s1 + $0xc8] sm:$0xff]
  %v54 = vld [vmem:[%s1 + $0xd0] sm:$0xff]
  %v55 = vld [vmem:[%s1 + $0xd8] sm:$0xff]
  %v56 = vld [vmem:[%s1 + $0xe0] sm:$0xff]
  %v57 = vld [vmem:[%s1 + $0xe8] sm:$0xff]
  %v58 = vld [vmem:[%s1 + $0xf0] sm:$0xff]
  %v59 = vld [vmem:[%s1 + $0xf8] sm:$0xff]
  %v92 = vunpack.c.l.b16 %v28
  %v93 = vunpack.c.h.b16 %v28
  %v94 = vunpack.c.l.b16 %v29
  %v95 = vunpack.c.h.b16 %v29
  %v96 = vunpack.c.l.b16 %v30
  %v97 = vunpack.c.h.b16 %v30
  %v98 = vunpack.c.l.b16 %v31
  %v99 = vunpack.c.h.b16 %v31
  %v100 = vunpack.c.l.b16 %v32
  %v101 = vunpack.c.h.b16 %v32
  %v102 = vunpack.c.l.b16 %v33
  %v103 = vunpack.c.h.b16 %v33
  %v104 = vunpack.c.l.b16 %v34
  %v105 = vunpack.c.h.b16 %v34
  %v106 = vunpack.c.l.b16 %v35
  %v107 = vunpack.c.h.b16 %v35
  %v108 = vunpack.c.l.b16 %v36
  %v109 = vunpack.c.h.b16 %v36
  %v110 = vunpack.c.l.b16 %v37
  %v111 = vunpack.c.h.b16 %v37
  %v112 = vunpack.c.l.b16 %v38
  %v113 = vunpack.c.h.b16 %v38
  %v114 = vunpack.c.l.b16 %v39
  %v115 = vunpack.c.h.b16 %v39
  %v116 = vunpack.c.l.b16 %v40
  %v117 = vunpack.c.h.b16 %v40
  %v118 = vunpack.c.l.b16 %v41
  %v119 = vunpack.c.h.b16 %v41
  %v120 = vunpack.c.l.b16 %v42
  %v121 = vunpack.c.h.b16 %v42
  %v122 = vunpack.c.l.b16 %v43
  %v123 = vunpack.c.h.b16 %v43
  %v124 = vunpack.c.l.b16 %v44
  %v125 = vunpack.c.h.b16 %v44
  %v126 = vunpack.c.l.b16 %v45
  %v127 = vunpack.c.h.b16 %v45
  %v128 = vunpack.c.l.b16 %v46
  %v129 = vunpack.c.h.b16 %v46
  %v130 = vunpack.c.l.b16 %v47
  %v131 = vunpack.c.h.b16 %v47
  %v132 = vunpack.c.l.b16 %v48
  %v133 = vunpack.c.h.b16 %v48
  %v134 = vunpack.c.l.b16 %v49
  %v135 = vunpack.c.h.b16 %v49
  %v136 = vunpack.c.l.b16 %v50
  %v137 = vunpack.c.h.b16 %v50
  %v138 = vunpack.c.l.b16 %v51
  %v139 = vunpack.c.h.b16 %v51
  %v140 = vunpack.c.l.b16 %v52
  %v141 = vunpack.c.h.b16 %v52
  %v142 = vunpack.c.l.b16 %v53
  %v143 = vunpack.c.h.b16 %v53
  %v144 = vunpack.c.l.b16 %v54
  %v145 = vunpack.c.h.b16 %v54
  %v146 = vunpack.c.l.b16 %v55
  %v147 = vunpack.c.h.b16 %v55
  %v148 = vunpack.c.l.b16 %v56
  %v149 = vunpack.c.h.b16 %v56
  %v150 = vunpack.c.l.b16 %v57
  %v151 = vunpack.c.h.b16 %v57
  %v152 = vunpack.c.l.b16 %v58
  %v153 = vunpack.c.h.b16 %v58
  %v154 = vunpack.c.l.b16 %v59
  %v155 = vunpack.c.h.b16 %v59
  %v156 = vpack.c.b16 %v96, %v92
  %v157 = vpack.c.b16 %v97, %v93
  %v158 = vpack.c.b16 %v98, %v94
  %v159 = vpack.c.b16 %v99, %v95
  %v160 = vpack.c.b16 %v104, %v100
  %v161 = vpack.c.b16 %v105, %v101
  %v162 = vpack.c.b16 %v106, %v102
  %v163 = vpack.c.b16 %v107, %v103
  %v164 = vpack.c.b16 %v112, %v108
  %v165 = vpack.c.b16 %v113, %v109
  %v166 = vpack.c.b16 %v114, %v110
  %v167 = vpack.c.b16 %v115, %v111
  %v168 = vpack.c.b16 %v120, %v116
  %v169 = vpack.c.b16 %v121, %v117
  %v170 = vpack.c.b16 %v122, %v118
  %v171 = vpack.c.b16 %v123, %v119
  %v172 = vpack.c.b16 %v128, %v124
  %v173 = vpack.c.b16 %v129, %v125
  %v174 = vpack.c.b16 %v130, %v126
  %v175 = vpack.c.b16 %v131, %v127
  %v176 = vpack.c.b16 %v136, %v132
  %v177 = vpack.c.b16 %v137, %v133
  %v178 = vpack.c.b16 %v138, %v134
  %v179 = vpack.c.b16 %v139, %v135
  %v180 = vpack.c.b16 %v144, %v140
  %v181 = vpack.c.b16 %v145, %v141
  %v182 = vpack.c.b16 %v146, %v142
  %v183 = vpack.c.b16 %v147, %v143
  %v184 = vpack.c.b16 %v152, %v148
  %v185 = vpack.c.b16 %v153, %v149
  %v186 = vpack.c.b16 %v154, %v150
  %v187 = vpack.c.b16 %v155, %v151
  %220 = vmatprep.subr.bf16.mxu0 %v157
  %221 = vmatpush1.bf16.msra.mxu0 %v156
  %222 = vmatprep.subr.bf16.mxu0 %v161
  %223 = vmatpush1.bf16.msra.mxu0 %v160
  %224 = vmatprep.subr.bf16.mxu0 %v165
  %225 = vmatpush1.bf16.msra.mxu0 %v164
  %226 = vmatprep.subr.bf16.mxu0 %v169
  %227 = vmatpush1.bf16.msra.mxu0 %v168
  %228 = vmatprep.subr.bf16.mxu0 %v173
  %229 = vmatpush1.bf16.msra.mxu0 %v172
  %230 = vmatprep.subr.bf16.mxu0 %v177
  %231 = vmatpush1.bf16.msra.mxu0 %v176
  %232 = vmatprep.subr.bf16.mxu0 %v181
  %233 = vmatpush1.bf16.msra.mxu0 %v180
  %234 = vmatprep.subr.bf16.mxu0 %v185
  %235 = vmatpush1.bf16.msra.mxu0 %v184
  %236 = vmatprep.subr.bf16.mxu0 0
  %237 = vmatpush1.bf16.msra.mxu0 0
  %238 = vmatprep.subr.bf16.mxu0 0
  %239 = vmatpush1.bf16.msra.mxu0 0
  %240 = vmatprep.subr.bf16.mxu0 0
  %241 = vmatpush1.bf16.msra.mxu0 0
  %242 = vmatprep.subr.bf16.mxu0 0
  %243 = vmatpush1.bf16.msra.mxu0 0
  %244 = vmatprep.subr.bf16.mxu0 0
  %245 = vmatpush1.bf16.msra.mxu0 0
  %246 = vmatprep.subr.bf16.mxu0 0
  %247 = vmatpush1.bf16.msra.mxu0 0
  %248 = vmatprep.subr.bf16.mxu0 0
  %249 = vmatpush1.bf16.msra.mxu0 0
  %250 = vmatprep.subr.bf16.mxu0 0
  %251 = vmatpush1.bf16.msra.mxu0 0
  %252 = vmatprep.mubr.bf16.mxu0 0
  %253 = vmatmul.mubr.bf16.gmra.mrb[0].mxu0 %v27
  %v254 = vpop.f32.mrb[0].mxu0
  %v255 = vadd.f32 0.0, %v254
  %v256 = vpop.f32.mrb[0].mxu0
  %v257 = vadd.f32 0.0, %v256
  %v258 = vpop.f32.mrb[0].mxu0
  %v259 = vpop.f32.mrb[0].mxu0
  %260 = vdwg.mxu0
  %261 = vmatprep.subr.bf16.mxu0 %v159
  %262 = vmatpush1.bf16.msra.mxu0 %v158
  %263 = vmatprep.subr.bf16.mxu0 %v163
  %264 = vmatpush1.bf16.msra.mxu0 %v162
  %265 = vmatprep.subr.bf16.mxu0 %v167
  %266 = vmatpush1.bf16.msra.mxu0 %v166
  %267 = vmatprep.subr.bf16.mxu0 %v171
  %268 = vmatpush1.bf16.msra.mxu0 %v170
  %269 = vmatprep.subr.bf16.mxu0 %v175
  %270 = vmatpush1.bf16.msra.mxu0 %v174
  %271 = vmatprep.subr.bf16.mxu0 %v179
  %272 = vmatpush1.bf16.msra.mxu0 %v178
  %273 = vmatprep.subr.bf16.mxu0 %v183
  %274 = vmatpush1.bf16.msra.mxu0 %v182
  %275 = vmatprep.subr.bf16.mxu0 %v187
  %276 = vmatpush1.bf16.msra.mxu0 %v186
  %277 = vmatprep.subr.bf16.mxu0 0
  %278 = vmatpush1.bf16.msra.mxu0 0
  %279 = vmatprep.subr.bf16.mxu0 0
  %280 = vmatpush1.bf16.msra.mxu0 0
  %281 = vmatprep.subr.bf16.mxu0 0
  %282 = vmatpush1.bf16.msra.mxu0 0
  %283 = vmatprep.subr.bf16.mxu0 0
  %284 = vmatpush1.bf16.msra.mxu0 0
  %285 = vmatprep.subr.bf16.mxu0 0
  %286 = vmatpush1.bf16.msra.mxu0 0
  %287 = vmatprep.subr.bf16.mxu0 0
  %288 = vmatpush1.bf16.msra.mxu0 0
  %289 = vmatprep.subr.bf16.mxu0 0
  %290 = vmatpush1.bf16.msra.mxu0 0
  %291 = vmatprep.subr.bf16.mxu0 0
  %292 = vmatpush1.bf16.msra.mxu0 0
  %293 = vmatprep.mubr.bf16.mxu0 0
  %294 = vmatmul.mubr.bf16.gmra.mrb[0].mxu0 %v27
  %v295 = vpop.f32.mrb[0].mxu0
  %v296 = vadd.f32 0.0, %v295
  %v297 = vpop.f32.mrb[0].mxu0
  %v298 = vadd.f32 0.0, %v297
  %v299 = vpop.f32.mrb[0].mxu0
  %v300 = vpop.f32.mrb[0].mxu0
  %301 = vdwg.mxu0
  %v302 = vadd.f32 %v23, %v255
  %v303 = vadd.f32 %v24, %v257
  %v304 = vadd.f32 %v25, %v296
  %v305 = vadd.f32 %v26, %v298
  %v306 = vxor.u32 %v302, 2147483648
  %v307 = vmul.f32 %v306, 1.442695
  %v308 = vpow.pop %v307
  %v309 = vadd.f32 %v308, 1.0
  %v310 = vrcp.pop %v309
  %v311 = vmul.f32 1.0, %v310
  %v312 = vxor.u32 %v303, 2147483648
  %v313 = vmul.f32 %v312, 1.442695
  %v314 = vpow.pop %v313
  %v315 = vadd.f32 %v314, 1.0
  %v316 = vrcp.pop %v315
  %v317 = vmul.f32 1.0, %v316
  %v318 = vtanh.pop %v304
  %v319 = vxor.u32 %v305, 2147483648
  %v320 = vmul.f32 %v319, 1.442695
  %v321 = vpow.pop %v320
  %v322 = vadd.f32 %v321, 1.0
  %v323 = vrcp.pop %v322
  %v324 = vmul.f32 1.0, %v323
  %v325 = vmul.f32 %v317, %v22
  %v326 = vmul.f32 %v311, %v318
  %v327 = vadd.f32 %v325, %v326
  %v328 = vtanh.pop %v327
  %v329 = vmul.f32 %v324, %v328
  %330 = vst [vmem:[%s2] sm:$0xff] %v329
  %p331 = scmp.lt.s32.totalorder %s20, 8
  %s332 = scalar_select %p331, 1, 0
  %v333 = vstv %s332
  %vm334 = vcmp.eq.s32.totalorder %v333, 1
  %v335 = vsel %vm334, %v329, %v21
  %v336 = vsel %vm334, %v327, %v22
  %s337 = scalar_lea.vmem %s0, 32
  %v338 = vld [vmem:[%s337] sm:$0xff]
  %v339 = vld [vmem:[%s337 + $0x8] sm:$0xff]
  %v340 = vld [vmem:[%s337 + $0x10] sm:$0xff]
  %v341 = vld [vmem:[%s337 + $0x18] sm:$0xff]
  %v342 = vpack.c.bf16 %v335, %v335
  %v343 = vld [vmem:[%s1] sm:$0xff]
  %v344 = vld [vmem:[%s1 + $0x8] sm:$0xff]
  %v345 = vld [vmem:[%s1 + $0x10] sm:$0xff]
  %v346 = vld [vmem:[%s1 + $0x18] sm:$0xff]
  %v347 = vld [vmem:[%s1 + $0x20] sm:$0xff]
  %v348 = vld [vmem:[%s1 + $0x28] sm:$0xff]
  %v349 = vld [vmem:[%s1 + $0x30] sm:$0xff]
  %v350 = vld [vmem:[%s1 + $0x38] sm:$0xff]
  %v351 = vld [vmem:[%s1 + $0x40] sm:$0xff]
  %v352 = vld [vmem:[%s1 + $0x48] sm:$0xff]
  %v353 = vld [vmem:[%s1 + $0x50] sm:$0xff]
  %v354 = vld [vmem:[%s1 + $0x58] sm:$0xff]
  %v355 = vld [vmem:[%s1 + $0x60] sm:$0xff]
  %v356 = vld [vmem:[%s1 + $0x68] sm:$0xff]
  %v357 = vld [vmem:[%s1 + $0x70] sm:$0xff]
  %v358 = vld [vmem:[%s1 + $0x78] sm:$0xff]
  %v359 = vld [vmem:[%s1 + $0x80] sm:$0xff]
  %v360 = vld [vmem:[%s1 + $0x88] sm:$0xff]
  %v361 = vld [vmem:[%s1 + $0x90] sm:$0xff]
  %v362 = vld [vmem:[%s1 + $0x98] sm:$0xff]
  %v363 = vld [vmem:[%s1 + $0xa0] sm:$0xff]
  %v364 = vld [vmem:[%s1 + $0xa8] sm:$0xff]
  %v365 = vld [vmem:[%s1 + $0xb0] sm:$0xff]
  %v366 = vld [vmem:[%s1 + $0xb8] sm:$0xff]
  %v367 = vld [vmem:[%s1 + $0xc0] sm:$0xff]
  %v368 = vld [vmem:[%s1 + $0xc8] sm:$0xff]
  %v369 = vld [vmem:[%s1 + $0xd0] sm:$0xff]
  %v370 = vld [vmem:[%s1 + $0xd8] sm:$0xff]
  %v371 = vld [vmem:[%s1 + $0xe0] sm:$0xff]
  %v372 = vld [vmem:[%s1 + $0xe8] sm:$0xff]
  %v373 = vld [vmem:[%s1 + $0xf0] sm:$0xff]
  %v374 = vld [vmem:[%s1 + $0xf8] sm:$0xff]
  %v407 = vunpack.c.l.b16 %v343
  %v408 = vunpack.c.h.b16 %v343
  %v409 = vunpack.c.l.b16 %v344
  %v410 = vunpack.c.h.b16 %v344
  %v411 = vunpack.c.l.b16 %v345
  %v412 = vunpack.c.h.b16 %v345
  %v413 = vunpack.c.l.b16 %v346
  %v414 = vunpack.c.h.b16 %v346
  %v415 = vunpack.c.l.b16 %v347
  %v416 = vunpack.c.h.b16 %v347
  %v417 = vunpack.c.l.b16 %v348
  %v418 = vunpack.c.h.b16 %v348
  %v419 = vunpack.c.l.b16 %v349
  %v420 = vunpack.c.h.b16 %v349
  %v421 = vunpack.c.l.b16 %v350
  %v422 = vunpack.c.h.b16 %v350
  %v423 = vunpack.c.l.b16 %v351
  %v424 = vunpack.c.h.b16 %v351
  %v425 = vunpack.c.l.b16 %v352
  %v426 = vunpack.c.h.b16 %v352
  %v427 = vunpack.c.l.b16 %v353
  %v428 = vunpack.c.h.b16 %v353
  %v429 = vunpack.c.l.b16 %v354
  %v430 = vunpack.c.h.b16 %v354
  %v431 = vunpack.c.l.b16 %v355
  %v432 = vunpack.c.h.b16 %v355
  %v433 = vunpack.c.l.b16 %v356
  %v434 = vunpack.c.h.b16 %v356
  %v435 = vunpack.c.l.b16 %v357
  %v436 = vunpack.c.h.b16 %v357
  %v437 = vunpack.c.l.b16 %v358
  %v438 = vunpack.c.h.b16 %v358
  %v439 = vunpack.c.l.b16 %v359
  %v440 = vunpack.c.h.b16 %v359
  %v441 = vunpack.c.l.b16 %v360
  %v442 = vunpack.c.h.b16 %v360
  %v443 = vunpack.c.l.b16 %v361
  %v444 = vunpack.c.h.b16 %v361
  %v445 = vunpack.c.l.b16 %v362
  %v446 = vunpack.c.h.b16 %v362
  %v447 = vunpack.c.l.b16 %v363
  %v448 = vunpack.c.h.b16 %v363
  %v449 = vunpack.c.l.b16 %v364
  %v450 = vunpack.c.h.b16 %v364
  %v451 = vunpack.c.l.b16 %v365
  %v452 = vunpack.c.h.b16 %v365
  %v453 = vunpack.c.l.b16 %v366
  %v454 = vunpack.c.h.b16 %v366
  %v455 = vunpack.c.l.b16 %v367
  %v456 = vunpack.c.h.b16 %v367
  %v457 = vunpack.c.l.b16 %v368
  %v458 = vunpack.c.h.b16 %v368
  %v459 = vunpack.c.l.b16 %v369
  %v460 = vunpack.c.h.b16 %v369
  %v461 = vunpack.c.l.b16 %v370
  %v462 = vunpack.c.h.b16 %v370
  %v463 = vunpack.c.l.b16 %v371
  %v464 = vunpack.c.h.b16 %v371
  %v465 = vunpack.c.l.b16 %v372
  %v466 = vunpack.c.h.b16 %v372
  %v467 = vunpack.c.l.b16 %v373
  %v468 = vunpack.c.h.b16 %v373
  %v469 = vunpack.c.l.b16 %v374
  %v470 = vunpack.c.h.b16 %v374
  %v471 = vpack.c.b16 %v411, %v407
  %v472 = vpack.c.b16 %v412, %v408
  %v473 = vpack.c.b16 %v413, %v409
  %v474 = vpack.c.b16 %v414, %v410
  %v475 = vpack.c.b16 %v419, %v415
  %v476 = vpack.c.b16 %v420, %v416
  %v477 = vpack.c.b16 %v421, %v417
  %v478 = vpack.c.b16 %v422, %v418
  %v479 = vpack.c.b16 %v427, %v423
  %v480 = vpack.c.b16 %v428, %v424
  %v481 = vpack.c.b16 %v429, %v425
  %v482 = vpack.c.b16 %v430, %v426
  %v483 = vpack.c.b16 %v435, %v431
  %v484 = vpack.c.b16 %v436, %v432
  %v485 = vpack.c.b16 %v437, %v433
  %v486 = vpack.c.b16 %v438, %v434
  %v487 = vpack.c.b16 %v443, %v439
  %v488 = vpack.c.b16 %v444, %v440
  %v489 = vpack.c.b16 %v445, %v441
  %v490 = vpack.c.b16 %v446, %v442
  %v491 = vpack.c.b16 %v451, %v447
  %v492 = vpack.c.b16 %v452, %v448
  %v493 = vpack.c.b16 %v453, %v449
  %v494 = vpack.c.b16 %v454, %v450
  %v495 = vpack.c.b16 %v459, %v455
  %v496 = vpack.c.b16 %v460, %v456
  %v497 = vpack.c.b16 %v461, %v457
  %v498 = vpack.c.b16 %v462, %v458
  %v499 = vpack.c.b16 %v467, %v463
  %v500 = vpack.c.b16 %v468, %v464
  %v501 = vpack.c.b16 %v469, %v465
  %v502 = vpack.c.b16 %v470, %v466
  %535 = vmatprep.subr.bf16.mxu0 %v472
  %536 = vmatpush1.bf16.msra.mxu0 %v471
  %537 = vmatprep.subr.bf16.mxu0 %v476
  %538 = vmatpush1.bf16.msra.mxu0 %v475
  %539 = vmatprep.subr.bf16.mxu0 %v480
  %540 = vmatpush1.bf16.msra.mxu0 %v479
  %541 = vmatprep.subr.bf16.mxu0 %v484
  %542 = vmatpush1.bf16.msra.mxu0 %v483
  %543 = vmatprep.subr.bf16.mxu0 %v488
  %544 = vmatpush1.bf16.msra.mxu0 %v487
  %545 = vmatprep.subr.bf16.mxu0 %v492
  %546 = vmatpush1.bf16.msra.mxu0 %v491
  %547 = vmatprep.subr.bf16.mxu0 %v496
  %548 = vmatpush1.bf16.msra.mxu0 %v495
  %549 = vmatprep.subr.bf16.mxu0 %v500
  %550 = vmatpush1.bf16.msra.mxu0 %v499
  %551 = vmatprep.subr.bf16.mxu0 0
  %552 = vmatpush1.bf16.msra.mxu0 0
  %553 = vmatprep.subr.bf16.mxu0 0
  %554 = vmatpush1.bf16.msra.mxu0 0
  %555 = vmatprep.subr.bf16.mxu0 0
  %556 = vmatpush1.bf16.msra.mxu0 0
  %557 = vmatprep.subr.bf16.mxu0 0
  %558 = vmatpush1.bf16.msra.mxu0 0
  %559 = vmatprep.subr.bf16.mxu0 0
  %560 = vmatpush1.bf16.msra.mxu0 0
  %561 = vmatprep.subr.bf16.mxu0 0
  %562 = vmatpush1.bf16.msra.mxu0 0
  %563 = vmatprep.subr.bf16.mxu0 0
  %564 = vmatpush1.bf16.msra.mxu0 0
  %565 = vmatprep.subr.bf16.mxu0 0
  %566 = vmatpush1.bf16.msra.mxu0 0
  %567 = vmatprep.mubr.bf16.mxu0 0
  %568 = vmatmul.mubr.bf16.gmra.mrb[0].mxu0 %v342
  %v569 = vpop.f32.mrb[0].mxu0
  %v570 = vadd.f32 0.0, %v569
  %v571 = vpop.f32.mrb[0].mxu0
  %v572 = vadd.f32 0.0, %v571
  %v573 = vpop.f32.mrb[0].mxu0
  %v574 = vpop.f32.mrb[0].mxu0
  %575 = vdwg.mxu0
  %576 = vmatprep.subr.bf16.mxu0 %v474
  %577 = vmatpush1.bf16.msra.mxu0 %v473
  %578 = vmatprep.subr.bf16.mxu0 %v478
  %579 = vmatpush1.bf16.msra.mxu0 %v477
  %580 = vmatprep.subr.bf16.mxu0 %v482
  %581 = vmatpush1.bf16.msra.mxu0 %v481
  %582 = vmatprep.subr.bf16.mxu0 %v486
  %583 = vmatpush1.bf16.msra.mxu0 %v485
  %584 = vmatprep.subr.bf16.mxu0 %v490
  %585 = vmatpush1.bf16.msra.mxu0 %v489
  %586 = vmatprep.subr.bf16.mxu0 %v494
  %587 = vmatpush1.bf16.msra.mxu0 %v493
  %588 = vmatprep.subr.bf16.mxu0 %v498
  %589 = vmatpush1.bf16.msra.mxu0 %v497
  %590 = vmatprep.subr.bf16.mxu0 %v502
  %591 = vmatpush1.bf16.msra.mxu0 %v501
  %592 = vmatprep.subr.bf16.mxu0 0
  %593 = vmatpush1.bf16.msra.mxu0 0
  %594 = vmatprep.subr.bf16.mxu0 0
  %595 = vmatpush1.bf16.msra.mxu0 0
  %596 = vmatprep.subr.bf16.mxu0 0
  %597 = vmatpush1.bf16.msra.mxu0 0
  %598 = vmatprep.subr.bf16.mxu0 0
  %599 = vmatpush1.bf16.msra.mxu0 0
  %600 = vmatprep.subr.bf16.mxu0 0
  %601 = vmatpush1.bf16.msra.mxu0 0
  %602 = vmatprep.subr.bf16.mxu0 0
  %603 = vmatpush1.bf16.msra.mxu0 0
  %604 = vmatprep.subr.bf16.mxu0 0
  %605 = vmatpush1.bf16.msra.mxu0 0
  %606 = vmatprep.subr.bf16.mxu0 0
  %607 = vmatpush1.bf16.msra.mxu0 0
  %608 = vmatprep.mubr.bf16.mxu0 0
  %609 = vmatmul.mubr.bf16.gmra.mrb[0].mxu0 %v342
  %v610 = vpop.f32.mrb[0].mxu0
  %v611 = vadd.f32 0.0, %v610
  %v612 = vpop.f32.mrb[0].mxu0
  %v613 = vadd.f32 0.0, %v612
  %v614 = vpop.f32.mrb[0].mxu0
  %v615 = vpop.f32.mrb[0].mxu0
  %616 = vdwg.mxu0
  %v617 = vadd.f32 %v338, %v570
  %v618 = vadd.f32 %v339, %v572
  %v619 = vadd.f32 %v340, %v611
  %v620 = vadd.f32 %v341, %v613
  %v621 = vxor.u32 %v617, 2147483648
  %v622 = vmul.f32 %v621, 1.442695
  %v623 = vpow.pop %v622
  %v624 = vadd.f32 %v623, 1.0
  %v625 = vrcp.pop %v624
  %v626 = vmul.f32 1.0, %v625
  %v627 = vxor.u32 %v618, 2147483648
  %v628 = vmul.f32 %v627, 1.442695
  %v629 = vpow.pop %v628
  %v630 = vadd.f32 %v629, 1.0
  %v631 = vrcp.pop %v630
  %v632 = vmul.f32 1.0, %v631
  %v633 = vtanh.pop %v619
  %v634 = vxor.u32 %v620, 2147483648
  %v635 = vmul.f32 %v634, 1.442695
  %v636 = vpow.pop %v635
  %v637 = vadd.f32 %v636, 1.0
  %v638 = vrcp.pop %v637
  %v639 = vmul.f32 1.0, %v638
  %v640 = vmul.f32 %v632, %v336
  %v641 = vmul.f32 %v626, %v633
  %v642 = vadd.f32 %v640, %v641
  %v643 = vtanh.pop %v642
  %v644 = vmul.f32 %v639, %v643
  %s645 = scalar_lea.vmem %s2, 8
  %646 = vst [vmem:[%s645] sm:$0xff] %v644
  %s647 = sadd.s32 %s20, 1
  %p648 = scmp.lt.s32.totalorder %s647, 8
  %s649 = scalar_select %p648, 1, 0
  %v650 = vstv %s649
  %vm651 = vcmp.eq.s32.totalorder %v650, 1
  %v652 = vsel %vm651, %v644, %v335
  %v653 = vsel %vm651, %v642, %v336
  %s654 = scalar_lea.vmem %s0, 64
  %v655 = vld [vmem:[%s654] sm:$0xff]
  %v656 = vld [vmem:[%s654 + $0x8] sm:$0xff]
  %v657 = vld [vmem:[%s654 + $0x10] sm:$0xff]
  %v658 = vld [vmem:[%s654 + $0x18] sm:$0xff]
  %v659 = vpack.c.bf16 %v652, %v652
  %v660 = vld [vmem:[%s1] sm:$0xff]
  %v661 = vld [vmem:[%s1 + $0x8] sm:$0xff]
  %v662 = vld [vmem:[%s1 + $0x10] sm:$0xff]
  %v663 = vld [vmem:[%s1 + $0x18] sm:$0xff]
  %v664 = vld [vmem:[%s1 + $0x20] sm:$0xff]
  %v665 = vld [vmem:[%s1 + $0x28] sm:$0xff]
  %v666 = vld [vmem:[%s1 + $0x30] sm:$0xff]
  %v667 = vld [vmem:[%s1 + $0x38] sm:$0xff]
  %v668 = vld [vmem:[%s1 + $0x40] sm:$0xff]
  %v669 = vld [vmem:[%s1 + $0x48] sm:$0xff]
  %v670 = vld [vmem:[%s1 + $0x50] sm:$0xff]
  %v671 = vld [vmem:[%s1 + $0x58] sm:$0xff]
  %v672 = vld [vmem:[%s1 + $0x60] sm:$0xff]
  %v673 = vld [vmem:[%s1 + $0x68] sm:$0xff]
  %v674 = vld [vmem:[%s1 + $0x70] sm:$0xff]
  %v675 = vld [vmem:[%s1 + $0x78] sm:$0xff]
  %v676 = vld [vmem:[%s1 + $0x80] sm:$0xff]
  %v677 = vld [vmem:[%s1 + $0x88] sm:$0xff]
  %v678 = vld [vmem:[%s1 + $0x90] sm:$0xff]
  %v679 = vld [vmem:[%s1 + $0x98] sm:$0xff]
  %v680 = vld [vmem:[%s1 + $0xa0] sm:$0xff]
  %v681 = vld [vmem:[%s1 + $0xa8] sm:$0xff]
  %v682 = vld [vmem:[%s1 + $0xb0] sm:$0xff]
  %v683 = vld [vmem:[%s1 + $0xb8] sm:$0xff]
  %v684 = vld [vmem:[%s1 + $0xc0] sm:$0xff]
  %v685 = vld [vmem:[%s1 + $0xc8] sm:$0xff]
  %v686 = vld [vmem:[%s1 + $0xd0] sm:$0xff]
  %v687 = vld [vmem:[%s1 + $0xd8] sm:$0xff]
  %v688 = vld [vmem:[%s1 + $0xe0] sm:$0xff]
  %v689 = vld [vmem:[%s1 + $0xe8] sm:$0xff]
  %v690 = vld [vmem:[%s1 + $0xf0] sm:$0xff]
  %v691 = vld [vmem:[%s1 + $0xf8] sm:$0xff]
  %v724 = vunpack.c.l.b16 %v660
  %v725 = vunpack.c.h.b16 %v660
  %v726 = vunpack.c.l.b16 %v661
  %v727 = vunpack.c.h.b16 %v661
  %v728 = vunpack.c.l.b16 %v662
  %v729 = vunpack.c.h.b16 %v662
  %v730 = vunpack.c.l.b16 %v663
  %v731 = vunpack.c.h.b16 %v663
  %v732 = vunpack.c.l.b16 %v664
  %v733 = vunpack.c.h.b16 %v664
  %v734 = vunpack.c.l.b16 %v665
  %v735 = vunpack.c.h.b16 %v665
  %v736 = vunpack.c.l.b16 %v666
  %v737 = vunpack.c.h.b16 %v666
  %v738 = vunpack.c.l.b16 %v667
  %v739 = vunpack.c.h.b16 %v667
  %v740 = vunpack.c.l.b16 %v668
  %v741 = vunpack.c.h.b16 %v668
  %v742 = vunpack.c.l.b16 %v669
  %v743 = vunpack.c.h.b16 %v669
  %v744 = vunpack.c.l.b16 %v670
  %v745 = vunpack.c.h.b16 %v670
  %v746 = vunpack.c.l.b16 %v671
  %v747 = vunpack.c.h.b16 %v671
  %v748 = vunpack.c.l.b16 %v672
  %v749 = vunpack.c.h.b16 %v672
  %v750 = vunpack.c.l.b16 %v673
  %v751 = vunpack.c.h.b16 %v673
  %v752 = vunpack.c.l.b16 %v674
  %v753 = vunpack.c.h.b16 %v674
  %v754 = vunpack.c.l.b16 %v675
  %v755 = vunpack.c.h.b16 %v675
  %v756 = vunpack.c.l.b16 %v676
  %v757 = vunpack.c.h.b16 %v676
  %v758 = vunpack.c.l.b16 %v677
  %v759 = vunpack.c.h.b16 %v677
  %v760 = vunpack.c.l.b16 %v678
  %v761 = vunpack.c.h.b16 %v678
  %v762 = vunpack.c.l.b16 %v679
  %v763 = vunpack.c.h.b16 %v679
  %v764 = vunpack.c.l.b16 %v680
  %v765 = vunpack.c.h.b16 %v680
  %v766 = vunpack.c.l.b16 %v681
  %v767 = vunpack.c.h.b16 %v681
  %v768 = vunpack.c.l.b16 %v682
  %v769 = vunpack.c.h.b16 %v682
  %v770 = vunpack.c.l.b16 %v683
  %v771 = vunpack.c.h.b16 %v683
  %v772 = vunpack.c.l.b16 %v684
  %v773 = vunpack.c.h.b16 %v684
  %v774 = vunpack.c.l.b16 %v685
  %v775 = vunpack.c.h.b16 %v685
  %v776 = vunpack.c.l.b16 %v686
  %v777 = vunpack.c.h.b16 %v686
  %v778 = vunpack.c.l.b16 %v687
  %v779 = vunpack.c.h.b16 %v687
  %v780 = vunpack.c.l.b16 %v688
  %v781 = vunpack.c.h.b16 %v688
  %v782 = vunpack.c.l.b16 %v689
  %v783 = vunpack.c.h.b16 %v689
  %v784 = vunpack.c.l.b16 %v690
  %v785 = vunpack.c.h.b16 %v690
  %v786 = vunpack.c.l.b16 %v691
  %v787 = vunpack.c.h.b16 %v691
  %v788 = vpack.c.b16 %v728, %v724
  %v789 = vpack.c.b16 %v729, %v725
  %v790 = vpack.c.b16 %v730, %v726
  %v791 = vpack.c.b16 %v731, %v727
  %v792 = vpack.c.b16 %v736, %v732
  %v793 = vpack.c.b16 %v737, %v733
  %v794 = vpack.c.b16 %v738, %v734
  %v795 = vpack.c.b16 %v739, %v735
  %v796 = vpack.c.b16 %v744, %v740
  %v797 = vpack.c.b16 %v745, %v741
  %v798 = vpack.c.b16 %v746, %v742
  %v799 = vpack.c.b16 %v747, %v743
  %v800 = vpack.c.b16 %v752, %v748
  %v801 = vpack.c.b16 %v753, %v749
  %v802 = vpack.c.b16 %v754, %v750
  %v803 = vpack.c.b16 %v755, %v751
  %v804 = vpack.c.b16 %v760, %v756
  %v805 = vpack.c.b16 %v761, %v757
  %v806 = vpack.c.b16 %v762, %v758
  %v807 = vpack.c.b16 %v763, %v759
  %v808 = vpack.c.b16 %v768, %v764
  %v809 = vpack.c.b16 %v769, %v765
  %v810 = vpack.c.b16 %v770, %v766
  %v811 = vpack.c.b16 %v771, %v767
  %v812 = vpack.c.b16 %v776, %v772
  %v813 = vpack.c.b16 %v777, %v773
  %v814 = vpack.c.b16 %v778, %v774
  %v815 = vpack.c.b16 %v779, %v775
  %v816 = vpack.c.b16 %v784, %v780
  %v817 = vpack.c.b16 %v785, %v781
  %v818 = vpack.c.b16 %v786, %v782
  %v819 = vpack.c.b16 %v787, %v783
  %852 = vmatprep.subr.bf16.mxu0 %v789
  %853 = vmatpush1.bf16.msra.mxu0 %v788
  %854 = vmatprep.subr.bf16.mxu0 %v793
  %855 = vmatpush1.bf16.msra.mxu0 %v792
  %856 = vmatprep.subr.bf16.mxu0 %v797
  %857 = vmatpush1.bf16.msra.mxu0 %v796
  %858 = vmatprep.subr.bf16.mxu0 %v801
  %859 = vmatpush1.bf16.msra.mxu0 %v800
  %860 = vmatprep.subr.bf16.mxu0 %v805
  %861 = vmatpush1.bf16.msra.mxu0 %v804
  %862 = vmatprep.subr.bf16.mxu0 %v809
  %863 = vmatpush1.bf16.msra.mxu0 %v808
  %864 = vmatprep.subr.bf16.mxu0 %v813
  %865 = vmatpush1.bf16.msra.mxu0 %v812
  %866 = vmatprep.subr.bf16.mxu0 %v817
  %867 = vmatpush1.bf16.msra.mxu0 %v816
  %868 = vmatprep.subr.bf16.mxu0 0
  %869 = vmatpush1.bf16.msra.mxu0 0
  %870 = vmatprep.subr.bf16.mxu0 0
  %871 = vmatpush1.bf16.msra.mxu0 0
  %872 = vmatprep.subr.bf16.mxu0 0
  %873 = vmatpush1.bf16.msra.mxu0 0
  %874 = vmatprep.subr.bf16.mxu0 0
  %875 = vmatpush1.bf16.msra.mxu0 0
  %876 = vmatprep.subr.bf16.mxu0 0
  %877 = vmatpush1.bf16.msra.mxu0 0
  %878 = vmatprep.subr.bf16.mxu0 0
  %879 = vmatpush1.bf16.msra.mxu0 0
  %880 = vmatprep.subr.bf16.mxu0 0
  %881 = vmatpush1.bf16.msra.mxu0 0
  %882 = vmatprep.subr.bf16.mxu0 0
  %883 = vmatpush1.bf16.msra.mxu0 0
  %884 = vmatprep.mubr.bf16.mxu0 0
  %885 = vmatmul.mubr.bf16.gmra.mrb[0].mxu0 %v659
  %v886 = vpop.f32.mrb[0].mxu0
  %v887 = vadd.f32 0.0, %v886
  %v888 = vpop.f32.mrb[0].mxu0
  %v889 = vadd.f32 0.0, %v888
  %v890 = vpop.f32.mrb[0].mxu0
  %v891 = vpop.f32.mrb[0].mxu0
  %892 = vdwg.mxu0
  %893 = vmatprep.subr.bf16.mxu0 %v791
  %894 = vmatpush1.bf16.msra.mxu0 %v790
  %895 = vmatprep.subr.bf16.mxu0 %v795
  %896 = vmatpush1.bf16.msra.mxu0 %v794
  %897 = vmatprep.subr.bf16.mxu0 %v799
  %898 = vmatpush1.bf16.msra.mxu0 %v798
  %899 = vmatprep.subr.bf16.mxu0 %v803
  %900 = vmatpush1.bf16.msra.mxu0 %v802
  %901 = vmatprep.subr.bf16.mxu0 %v807
  %902 = vmatpush1.bf16.msra.mxu0 %v806
  %903 = vmatprep.subr.bf16.mxu0 %v811
  %904 = vmatpush1.bf16.msra.mxu0 %v810
  %905 = vmatprep.subr.bf16.mxu0 %v815
  %906 = vmatpush1.bf16.msra.mxu0 %v814
  %907 = vmatprep.subr.bf16.mxu0 %v819
  %908 = vmatpush1.bf16.msra.mxu0 %v818
  %909 = vmatprep.subr.bf16.mxu0 0
  %910 = vmatpush1.bf16.msra.mxu0 0
  %911 = vmatprep.subr.bf16.mxu0 0
  %912 = vmatpush1.bf16.msra.mxu0 0
  %913 = vmatprep.subr.bf16.mxu0 0
  %914 = vmatpush1.bf16.msra.mxu0 0
  %915 = vmatprep.subr.bf16.mxu0 0
  %916 = vmatpush1.bf16.msra.mxu0 0
  %917 = vmatprep.subr.bf16.mxu0 0
  %918 = vmatpush1.bf16.msra.mxu0 0
  %919 = vmatprep.subr.bf16.mxu0 0
  %920 = vmatpush1.bf16.msra.mxu0 0
  %921 = vmatprep.subr.bf16.mxu0 0
  %922 = vmatpush1.bf16.msra.mxu0 0
  %923 = vmatprep.subr.bf16.mxu0 0
  %924 = vmatpush1.bf16.msra.mxu0 0
  %925 = vmatprep.mubr.bf16.mxu0 0
  %926 = vmatmul.mubr.bf16.gmra.mrb[0].mxu0 %v659
  %v927 = vpop.f32.mrb[0].mxu0
  %v928 = vadd.f32 0.0, %v927
  %v929 = vpop.f32.mrb[0].mxu0
  %v930 = vadd.f32 0.0, %v929
  %v931 = vpop.f32.mrb[0].mxu0
  %v932 = vpop.f32.mrb[0].mxu0
  %933 = vdwg.mxu0
  %v934 = vadd.f32 %v655, %v887
  %v935 = vadd.f32 %v656, %v889
  %v936 = vadd.f32 %v657, %v928
  %v937 = vadd.f32 %v658, %v930
  %v938 = vxor.u32 %v934, 2147483648
  %v939 = vmul.f32 %v938, 1.442695
  %v940 = vpow.pop %v939
  %v941 = vadd.f32 %v940, 1.0
  %v942 = vrcp.pop %v941
  %v943 = vmul.f32 1.0, %v942
  %v944 = vxor.u32 %v935, 2147483648
  %v945 = vmul.f32 %v944, 1.442695
  %v946 = vpow.pop %v945
  %v947 = vadd.f32 %v946, 1.0
  %v948 = vrcp.pop %v947
  %v949 = vmul.f32 1.0, %v948
  %v950 = vtanh.pop %v936
  %v951 = vxor.u32 %v937, 2147483648
  %v952 = vmul.f32 %v951, 1.442695
  %v953 = vpow.pop %v952
  %v954 = vadd.f32 %v953, 1.0
  %v955 = vrcp.pop %v954
  %v956 = vmul.f32 1.0, %v955
  %v957 = vmul.f32 %v949, %v653
  %v958 = vmul.f32 %v943, %v950
  %v959 = vadd.f32 %v957, %v958
  %v960 = vtanh.pop %v959
  %v961 = vmul.f32 %v956, %v960
  %s962 = scalar_lea.vmem %s2, 16
  %963 = vst [vmem:[%s962] sm:$0xff] %v961
  %s964 = sadd.s32 %s20, 2
  %p965 = scmp.lt.s32.totalorder %s964, 8
  %s966 = scalar_select %p965, 1, 0
  %v967 = vstv %s966
  %vm968 = vcmp.eq.s32.totalorder %v967, 1
  %v969 = vsel %vm968, %v961, %v652
  %v970 = vsel %vm968, %v959, %v653
  %s971 = scalar_lea.vmem %s0, 96
  %v972 = vld [vmem:[%s971] sm:$0xff]
  %v973 = vld [vmem:[%s971 + $0x8] sm:$0xff]
  %v974 = vld [vmem:[%s971 + $0x10] sm:$0xff]
  %v975 = vld [vmem:[%s971 + $0x18] sm:$0xff]
  %v976 = vpack.c.bf16 %v969, %v969
  %v977 = vld [vmem:[%s1] sm:$0xff]
  %v978 = vld [vmem:[%s1 + $0x8] sm:$0xff]
  %v979 = vld [vmem:[%s1 + $0x10] sm:$0xff]
  %v980 = vld [vmem:[%s1 + $0x18] sm:$0xff]
  %v981 = vld [vmem:[%s1 + $0x20] sm:$0xff]
  %v982 = vld [vmem:[%s1 + $0x28] sm:$0xff]
  %v983 = vld [vmem:[%s1 + $0x30] sm:$0xff]
  %v984 = vld [vmem:[%s1 + $0x38] sm:$0xff]
  %v985 = vld [vmem:[%s1 + $0x40] sm:$0xff]
  %v986 = vld [vmem:[%s1 + $0x48] sm:$0xff]
  %v987 = vld [vmem:[%s1 + $0x50] sm:$0xff]
  %v988 = vld [vmem:[%s1 + $0x58] sm:$0xff]
  %v989 = vld [vmem:[%s1 + $0x60] sm:$0xff]
  %v990 = vld [vmem:[%s1 + $0x68] sm:$0xff]
  %v991 = vld [vmem:[%s1 + $0x70] sm:$0xff]
  %v992 = vld [vmem:[%s1 + $0x78] sm:$0xff]
  %v993 = vld [vmem:[%s1 + $0x80] sm:$0xff]
  %v994 = vld [vmem:[%s1 + $0x88] sm:$0xff]
  %v995 = vld [vmem:[%s1 + $0x90] sm:$0xff]
  %v996 = vld [vmem:[%s1 + $0x98] sm:$0xff]
  %v997 = vld [vmem:[%s1 + $0xa0] sm:$0xff]
  %v998 = vld [vmem:[%s1 + $0xa8] sm:$0xff]
  %v999 = vld [vmem:[%s1 + $0xb0] sm:$0xff]
  %v1000 = vld [vmem:[%s1 + $0xb8] sm:$0xff]
  %v1001 = vld [vmem:[%s1 + $0xc0] sm:$0xff]
  %v1002 = vld [vmem:[%s1 + $0xc8] sm:$0xff]
  %v1003 = vld [vmem:[%s1 + $0xd0] sm:$0xff]
  %v1004 = vld [vmem:[%s1 + $0xd8] sm:$0xff]
  %v1005 = vld [vmem:[%s1 + $0xe0] sm:$0xff]
  %v1006 = vld [vmem:[%s1 + $0xe8] sm:$0xff]
  %v1007 = vld [vmem:[%s1 + $0xf0] sm:$0xff]
  %v1008 = vld [vmem:[%s1 + $0xf8] sm:$0xff]
  %v1041 = vunpack.c.l.b16 %v977
  %v1042 = vunpack.c.h.b16 %v977
  %v1043 = vunpack.c.l.b16 %v978
  %v1044 = vunpack.c.h.b16 %v978
  %v1045 = vunpack.c.l.b16 %v979
  %v1046 = vunpack.c.h.b16 %v979
  %v1047 = vunpack.c.l.b16 %v980
  %v1048 = vunpack.c.h.b16 %v980
  %v1049 = vunpack.c.l.b16 %v981
  %v1050 = vunpack.c.h.b16 %v981
  %v1051 = vunpack.c.l.b16 %v982
  %v1052 = vunpack.c.h.b16 %v982
  %v1053 = vunpack.c.l.b16 %v983
  %v1054 = vunpack.c.h.b16 %v983
  %v1055 = vunpack.c.l.b16 %v984
  %v1056 = vunpack.c.h.b16 %v984
  %v1057 = vunpack.c.l.b16 %v985
  %v1058 = vunpack.c.h.b16 %v985
  %v1059 = vunpack.c.l.b16 %v986
  %v1060 = vunpack.c.h.b16 %v986
  %v1061 = vunpack.c.l.b16 %v987
  %v1062 = vunpack.c.h.b16 %v987
  %v1063 = vunpack.c.l.b16 %v988
  %v1064 = vunpack.c.h.b16 %v988
  %v1065 = vunpack.c.l.b16 %v989
  %v1066 = vunpack.c.h.b16 %v989
  %v1067 = vunpack.c.l.b16 %v990
  %v1068 = vunpack.c.h.b16 %v990
  %v1069 = vunpack.c.l.b16 %v991
  %v1070 = vunpack.c.h.b16 %v991
  %v1071 = vunpack.c.l.b16 %v992
  %v1072 = vunpack.c.h.b16 %v992
  %v1073 = vunpack.c.l.b16 %v993
  %v1074 = vunpack.c.h.b16 %v993
  %v1075 = vunpack.c.l.b16 %v994
  %v1076 = vunpack.c.h.b16 %v994
  %v1077 = vunpack.c.l.b16 %v995
  %v1078 = vunpack.c.h.b16 %v995
  %v1079 = vunpack.c.l.b16 %v996
  %v1080 = vunpack.c.h.b16 %v996
  %v1081 = vunpack.c.l.b16 %v997
  %v1082 = vunpack.c.h.b16 %v997
  %v1083 = vunpack.c.l.b16 %v998
  %v1084 = vunpack.c.h.b16 %v998
  %v1085 = vunpack.c.l.b16 %v999
  %v1086 = vunpack.c.h.b16 %v999
  %v1087 = vunpack.c.l.b16 %v1000
  %v1088 = vunpack.c.h.b16 %v1000
  %v1089 = vunpack.c.l.b16 %v1001
  %v1090 = vunpack.c.h.b16 %v1001
  %v1091 = vunpack.c.l.b16 %v1002
  %v1092 = vunpack.c.h.b16 %v1002
  %v1093 = vunpack.c.l.b16 %v1003
  %v1094 = vunpack.c.h.b16 %v1003
  %v1095 = vunpack.c.l.b16 %v1004
  %v1096 = vunpack.c.h.b16 %v1004
  %v1097 = vunpack.c.l.b16 %v1005
  %v1098 = vunpack.c.h.b16 %v1005
  %v1099 = vunpack.c.l.b16 %v1006
  %v1100 = vunpack.c.h.b16 %v1006
  %v1101 = vunpack.c.l.b16 %v1007
  %v1102 = vunpack.c.h.b16 %v1007
  %v1103 = vunpack.c.l.b16 %v1008
  %v1104 = vunpack.c.h.b16 %v1008
  %v1105 = vpack.c.b16 %v1045, %v1041
  %v1106 = vpack.c.b16 %v1046, %v1042
  %v1107 = vpack.c.b16 %v1047, %v1043
  %v1108 = vpack.c.b16 %v1048, %v1044
  %v1109 = vpack.c.b16 %v1053, %v1049
  %v1110 = vpack.c.b16 %v1054, %v1050
  %v1111 = vpack.c.b16 %v1055, %v1051
  %v1112 = vpack.c.b16 %v1056, %v1052
  %v1113 = vpack.c.b16 %v1061, %v1057
  %v1114 = vpack.c.b16 %v1062, %v1058
  %v1115 = vpack.c.b16 %v1063, %v1059
  %v1116 = vpack.c.b16 %v1064, %v1060
  %v1117 = vpack.c.b16 %v1069, %v1065
  %v1118 = vpack.c.b16 %v1070, %v1066
  %v1119 = vpack.c.b16 %v1071, %v1067
  %v1120 = vpack.c.b16 %v1072, %v1068
  %v1121 = vpack.c.b16 %v1077, %v1073
  %v1122 = vpack.c.b16 %v1078, %v1074
  %v1123 = vpack.c.b16 %v1079, %v1075
  %v1124 = vpack.c.b16 %v1080, %v1076
  %v1125 = vpack.c.b16 %v1085, %v1081
  %v1126 = vpack.c.b16 %v1086, %v1082
  %v1127 = vpack.c.b16 %v1087, %v1083
  %v1128 = vpack.c.b16 %v1088, %v1084
  %v1129 = vpack.c.b16 %v1093, %v1089
  %v1130 = vpack.c.b16 %v1094, %v1090
  %v1131 = vpack.c.b16 %v1095, %v1091
  %v1132 = vpack.c.b16 %v1096, %v1092
  %v1133 = vpack.c.b16 %v1101, %v1097
  %v1134 = vpack.c.b16 %v1102, %v1098
  %v1135 = vpack.c.b16 %v1103, %v1099
  %v1136 = vpack.c.b16 %v1104, %v1100
  %1169 = vmatprep.subr.bf16.mxu0 %v1106
  %1170 = vmatpush1.bf16.msra.mxu0 %v1105
  %1171 = vmatprep.subr.bf16.mxu0 %v1110
  %1172 = vmatpush1.bf16.msra.mxu0 %v1109
  %1173 = vmatprep.subr.bf16.mxu0 %v1114
  %1174 = vmatpush1.bf16.msra.mxu0 %v1113
  %1175 = vmatprep.subr.bf16.mxu0 %v1118
  %1176 = vmatpush1.bf16.msra.mxu0 %v1117
  %1177 = vmatprep.subr.bf16.mxu0 %v1122
  %1178 = vmatpush1.bf16.msra.mxu0 %v1121
  %1179 = vmatprep.subr.bf16.mxu0 %v1126
  %1180 = vmatpush1.bf16.msra.mxu0 %v1125
  %1181 = vmatprep.subr.bf16.mxu0 %v1130
  %1182 = vmatpush1.bf16.msra.mxu0 %v1129
  %1183 = vmatprep.subr.bf16.mxu0 %v1134
  %1184 = vmatpush1.bf16.msra.mxu0 %v1133
  %1185 = vmatprep.subr.bf16.mxu0 0
  %1186 = vmatpush1.bf16.msra.mxu0 0
  %1187 = vmatprep.subr.bf16.mxu0 0
  %1188 = vmatpush1.bf16.msra.mxu0 0
  %1189 = vmatprep.subr.bf16.mxu0 0
  %1190 = vmatpush1.bf16.msra.mxu0 0
  %1191 = vmatprep.subr.bf16.mxu0 0
  %1192 = vmatpush1.bf16.msra.mxu0 0
  %1193 = vmatprep.subr.bf16.mxu0 0
  %1194 = vmatpush1.bf16.msra.mxu0 0
  %1195 = vmatprep.subr.bf16.mxu0 0
  %1196 = vmatpush1.bf16.msra.mxu0 0
  %1197 = vmatprep.subr.bf16.mxu0 0
  %1198 = vmatpush1.bf16.msra.mxu0 0
  %1199 = vmatprep.subr.bf16.mxu0 0
  %1200 = vmatpush1.bf16.msra.mxu0 0
  %1201 = vmatprep.mubr.bf16.mxu0 0
  %1202 = vmatmul.mubr.bf16.gmra.mrb[0].mxu0 %v976
  %v1203 = vpop.f32.mrb[0].mxu0
  %v1204 = vadd.f32 0.0, %v1203
  %v1205 = vpop.f32.mrb[0].mxu0
  %v1206 = vadd.f32 0.0, %v1205
  %v1207 = vpop.f32.mrb[0].mxu0
  %v1208 = vpop.f32.mrb[0].mxu0
  %1209 = vdwg.mxu0
  %1210 = vmatprep.subr.bf16.mxu0 %v1108
  %1211 = vmatpush1.bf16.msra.mxu0 %v1107
  %1212 = vmatprep.subr.bf16.mxu0 %v1112
  %1213 = vmatpush1.bf16.msra.mxu0 %v1111
  %1214 = vmatprep.subr.bf16.mxu0 %v1116
  %1215 = vmatpush1.bf16.msra.mxu0 %v1115
  %1216 = vmatprep.subr.bf16.mxu0 %v1120
  %1217 = vmatpush1.bf16.msra.mxu0 %v1119
  %1218 = vmatprep.subr.bf16.mxu0 %v1124
  %1219 = vmatpush1.bf16.msra.mxu0 %v1123
  %1220 = vmatprep.subr.bf16.mxu0 %v1128
  %1221 = vmatpush1.bf16.msra.mxu0 %v1127
  %1222 = vmatprep.subr.bf16.mxu0 %v1132
  %1223 = vmatpush1.bf16.msra.mxu0 %v1131
  %1224 = vmatprep.subr.bf16.mxu0 %v1136
  %1225 = vmatpush1.bf16.msra.mxu0 %v1135
  %1226 = vmatprep.subr.bf16.mxu0 0
  %1227 = vmatpush1.bf16.msra.mxu0 0
  %1228 = vmatprep.subr.bf16.mxu0 0
  %1229 = vmatpush1.bf16.msra.mxu0 0
  %1230 = vmatprep.subr.bf16.mxu0 0
  %1231 = vmatpush1.bf16.msra.mxu0 0
  %1232 = vmatprep.subr.bf16.mxu0 0
  %1233 = vmatpush1.bf16.msra.mxu0 0
  %1234 = vmatprep.subr.bf16.mxu0 0
  %1235 = vmatpush1.bf16.msra.mxu0 0
  %1236 = vmatprep.subr.bf16.mxu0 0
  %1237 = vmatpush1.bf16.msra.mxu0 0
  %1238 = vmatprep.subr.bf16.mxu0 0
  %1239 = vmatpush1.bf16.msra.mxu0 0
  %1240 = vmatprep.subr.bf16.mxu0 0
  %1241 = vmatpush1.bf16.msra.mxu0 0
  %1242 = vmatprep.mubr.bf16.mxu0 0
  %1243 = vmatmul.mubr.bf16.gmra.mrb[0].mxu0 %v976
  %v1244 = vpop.f32.mrb[0].mxu0
  %v1245 = vadd.f32 0.0, %v1244
  %v1246 = vpop.f32.mrb[0].mxu0
  %v1247 = vadd.f32 0.0, %v1246
  %v1248 = vpop.f32.mrb[0].mxu0
  %v1249 = vpop.f32.mrb[0].mxu0
  %1250 = vdwg.mxu0
  %v1251 = vadd.f32 %v972, %v1204
  %v1252 = vadd.f32 %v973, %v1206
  %v1253 = vadd.f32 %v974, %v1245
  %v1254 = vadd.f32 %v975, %v1247
  %v1255 = vxor.u32 %v1251, 2147483648
  %v1256 = vmul.f32 %v1255, 1.442695
  %v1257 = vpow.pop %v1256
  %v1258 = vadd.f32 %v1257, 1.0
  %v1259 = vrcp.pop %v1258
  %v1260 = vmul.f32 1.0, %v1259
  %v1261 = vxor.u32 %v1252, 2147483648
  %v1262 = vmul.f32 %v1261, 1.442695
  %v1263 = vpow.pop %v1262
  %v1264 = vadd.f32 %v1263, 1.0
  %v1265 = vrcp.pop %v1264
  %v1266 = vmul.f32 1.0, %v1265
  %v1267 = vtanh.pop %v1253
  %v1268 = vxor.u32 %v1254, 2147483648
  %v1269 = vmul.f32 %v1268, 1.442695
  %v1270 = vpow.pop %v1269
  %v1271 = vadd.f32 %v1270, 1.0
  %v1272 = vrcp.pop %v1271
  %v1273 = vmul.f32 1.0, %v1272
  %v1274 = vmul.f32 %v1266, %v970
  %v1275 = vmul.f32 %v1260, %v1267
  %v1276 = vadd.f32 %v1274, %v1275
  %v1277 = vtanh.pop %v1276
  %v1278 = vmul.f32 %v1273, %v1277
  %s1279 = scalar_lea.vmem %s2, 24
  %1280 = vst [vmem:[%s1279] sm:$0xff] %v1278
  %s1281 = sadd.s32 %s20, 3
  %p1282 = scmp.lt.s32.totalorder %s1281, 8
  %s1283 = scalar_select %p1282, 1, 0
  %v1284 = vstv %s1283
  %vm1285 = vcmp.eq.s32.totalorder %v1284, 1
  %v1286 = vsel %vm1285, %v1278, %v969
  %v1287 = vsel %vm1285, %v1276, %v970
  %s1288 = scalar_lea.vmem %s0, 128
  %v1289 = vld [vmem:[%s1288] sm:$0xff]
  %v1290 = vld [vmem:[%s1288 + $0x8] sm:$0xff]
  %v1291 = vld [vmem:[%s1288 + $0x10] sm:$0xff]
  %v1292 = vld [vmem:[%s1288 + $0x18] sm:$0xff]
  %v1293 = vpack.c.bf16 %v1286, %v1286
  %v1294 = vld [vmem:[%s1] sm:$0xff]
  %v1295 = vld [vmem:[%s1 + $0x8] sm:$0xff]
  %v1296 = vld [vmem:[%s1 + $0x10] sm:$0xff]
  %v1297 = vld [vmem:[%s1 + $0x18] sm:$0xff]
  %v1298 = vld [vmem:[%s1 + $0x20] sm:$0xff]
  %v1299 = vld [vmem:[%s1 + $0x28] sm:$0xff]
  %v1300 = vld [vmem:[%s1 + $0x30] sm:$0xff]
  %v1301 = vld [vmem:[%s1 + $0x38] sm:$0xff]
  %v1302 = vld [vmem:[%s1 + $0x40] sm:$0xff]
  %v1303 = vld [vmem:[%s1 + $0x48] sm:$0xff]
  %v1304 = vld [vmem:[%s1 + $0x50] sm:$0xff]
  %v1305 = vld [vmem:[%s1 + $0x58] sm:$0xff]
  %v1306 = vld [vmem:[%s1 + $0x60] sm:$0xff]
  %v1307 = vld [vmem:[%s1 + $0x68] sm:$0xff]
  %v1308 = vld [vmem:[%s1 + $0x70] sm:$0xff]
  %v1309 = vld [vmem:[%s1 + $0x78] sm:$0xff]
  %v1310 = vld [vmem:[%s1 + $0x80] sm:$0xff]
  %v1311 = vld [vmem:[%s1 + $0x88] sm:$0xff]
  %v1312 = vld [vmem:[%s1 + $0x90] sm:$0xff]
  %v1313 = vld [vmem:[%s1 + $0x98] sm:$0xff]
  %v1314 = vld [vmem:[%s1 + $0xa0] sm:$0xff]
  %v1315 = vld [vmem:[%s1 + $0xa8] sm:$0xff]
  %v1316 = vld [vmem:[%s1 + $0xb0] sm:$0xff]
  %v1317 = vld [vmem:[%s1 + $0xb8] sm:$0xff]
  %v1318 = vld [vmem:[%s1 + $0xc0] sm:$0xff]
  %v1319 = vld [vmem:[%s1 + $0xc8] sm:$0xff]
  %v1320 = vld [vmem:[%s1 + $0xd0] sm:$0xff]
  %v1321 = vld [vmem:[%s1 + $0xd8] sm:$0xff]
  %v1322 = vld [vmem:[%s1 + $0xe0] sm:$0xff]
  %v1323 = vld [vmem:[%s1 + $0xe8] sm:$0xff]
  %v1324 = vld [vmem:[%s1 + $0xf0] sm:$0xff]
  %v1325 = vld [vmem:[%s1 + $0xf8] sm:$0xff]
  %v1358 = vunpack.c.l.b16 %v1294
  %v1359 = vunpack.c.h.b16 %v1294
  %v1360 = vunpack.c.l.b16 %v1295
  %v1361 = vunpack.c.h.b16 %v1295
  %v1362 = vunpack.c.l.b16 %v1296
  %v1363 = vunpack.c.h.b16 %v1296
  %v1364 = vunpack.c.l.b16 %v1297
  %v1365 = vunpack.c.h.b16 %v1297
  %v1366 = vunpack.c.l.b16 %v1298
  %v1367 = vunpack.c.h.b16 %v1298
  %v1368 = vunpack.c.l.b16 %v1299
  %v1369 = vunpack.c.h.b16 %v1299
  %v1370 = vunpack.c.l.b16 %v1300
  %v1371 = vunpack.c.h.b16 %v1300
  %v1372 = vunpack.c.l.b16 %v1301
  %v1373 = vunpack.c.h.b16 %v1301
  %v1374 = vunpack.c.l.b16 %v1302
  %v1375 = vunpack.c.h.b16 %v1302
  %v1376 = vunpack.c.l.b16 %v1303
  %v1377 = vunpack.c.h.b16 %v1303
  %v1378 = vunpack.c.l.b16 %v1304
  %v1379 = vunpack.c.h.b16 %v1304
  %v1380 = vunpack.c.l.b16 %v1305
  %v1381 = vunpack.c.h.b16 %v1305
  %v1382 = vunpack.c.l.b16 %v1306
  %v1383 = vunpack.c.h.b16 %v1306
  %v1384 = vunpack.c.l.b16 %v1307
  %v1385 = vunpack.c.h.b16 %v1307
  %v1386 = vunpack.c.l.b16 %v1308
  %v1387 = vunpack.c.h.b16 %v1308
  %v1388 = vunpack.c.l.b16 %v1309
  %v1389 = vunpack.c.h.b16 %v1309
  %v1390 = vunpack.c.l.b16 %v1310
  %v1391 = vunpack.c.h.b16 %v1310
  %v1392 = vunpack.c.l.b16 %v1311
  %v1393 = vunpack.c.h.b16 %v1311
  %v1394 = vunpack.c.l.b16 %v1312
  %v1395 = vunpack.c.h.b16 %v1312
  %v1396 = vunpack.c.l.b16 %v1313
  %v1397 = vunpack.c.h.b16 %v1313
  %v1398 = vunpack.c.l.b16 %v1314
  %v1399 = vunpack.c.h.b16 %v1314
  %v1400 = vunpack.c.l.b16 %v1315
  %v1401 = vunpack.c.h.b16 %v1315
  %v1402 = vunpack.c.l.b16 %v1316
  %v1403 = vunpack.c.h.b16 %v1316
  %v1404 = vunpack.c.l.b16 %v1317
  %v1405 = vunpack.c.h.b16 %v1317
  %v1406 = vunpack.c.l.b16 %v1318
  %v1407 = vunpack.c.h.b16 %v1318
  %v1408 = vunpack.c.l.b16 %v1319
  %v1409 = vunpack.c.h.b16 %v1319
  %v1410 = vunpack.c.l.b16 %v1320
  %v1411 = vunpack.c.h.b16 %v1320
  %v1412 = vunpack.c.l.b16 %v1321
  %v1413 = vunpack.c.h.b16 %v1321
  %v1414 = vunpack.c.l.b16 %v1322
  %v1415 = vunpack.c.h.b16 %v1322
  %v1416 = vunpack.c.l.b16 %v1323
  %v1417 = vunpack.c.h.b16 %v1323
  %v1418 = vunpack.c.l.b16 %v1324
  %v1419 = vunpack.c.h.b16 %v1324
  %v1420 = vunpack.c.l.b16 %v1325
  %v1421 = vunpack.c.h.b16 %v1325
  %v1422 = vpack.c.b16 %v1362, %v1358
  %v1423 = vpack.c.b16 %v1363, %v1359
  %v1424 = vpack.c.b16 %v1364, %v1360
  %v1425 = vpack.c.b16 %v1365, %v1361
  %v1426 = vpack.c.b16 %v1370, %v1366
  %v1427 = vpack.c.b16 %v1371, %v1367
  %v1428 = vpack.c.b16 %v1372, %v1368
  %v1429 = vpack.c.b16 %v1373, %v1369
  %v1430 = vpack.c.b16 %v1378, %v1374
  %v1431 = vpack.c.b16 %v1379, %v1375
  %v1432 = vpack.c.b16 %v1380, %v1376
  %v1433 = vpack.c.b16 %v1381, %v1377
  %v1434 = vpack.c.b16 %v1386, %v1382
  %v1435 = vpack.c.b16 %v1387, %v1383
  %v1436 = vpack.c.b16 %v1388, %v1384
  %v1437 = vpack.c.b16 %v1389, %v1385
  %v1438 = vpack.c.b16 %v1394, %v1390
  %v1439 = vpack.c.b16 %v1395, %v1391
  %v1440 = vpack.c.b16 %v1396, %v1392
  %v1441 = vpack.c.b16 %v1397, %v1393
  %v1442 = vpack.c.b16 %v1402, %v1398
  %v1443 = vpack.c.b16 %v1403, %v1399
  %v1444 = vpack.c.b16 %v1404, %v1400
  %v1445 = vpack.c.b16 %v1405, %v1401
  %v1446 = vpack.c.b16 %v1410, %v1406
  %v1447 = vpack.c.b16 %v1411, %v1407
  %v1448 = vpack.c.b16 %v1412, %v1408
  %v1449 = vpack.c.b16 %v1413, %v1409
  %v1450 = vpack.c.b16 %v1418, %v1414
  %v1451 = vpack.c.b16 %v1419, %v1415
  %v1452 = vpack.c.b16 %v1420, %v1416
  %v1453 = vpack.c.b16 %v1421, %v1417
  %1486 = vmatprep.subr.bf16.mxu0 %v1423
  %1487 = vmatpush1.bf16.msra.mxu0 %v1422
  %1488 = vmatprep.subr.bf16.mxu0 %v1427
  %1489 = vmatpush1.bf16.msra.mxu0 %v1426
  %1490 = vmatprep.subr.bf16.mxu0 %v1431
  %1491 = vmatpush1.bf16.msra.mxu0 %v1430
  %1492 = vmatprep.subr.bf16.mxu0 %v1435
  %1493 = vmatpush1.bf16.msra.mxu0 %v1434
  %1494 = vmatprep.subr.bf16.mxu0 %v1439
  %1495 = vmatpush1.bf16.msra.mxu0 %v1438
  %1496 = vmatprep.subr.bf16.mxu0 %v1443
  %1497 = vmatpush1.bf16.msra.mxu0 %v1442
  %1498 = vmatprep.subr.bf16.mxu0 %v1447
  %1499 = vmatpush1.bf16.msra.mxu0 %v1446
  %1500 = vmatprep.subr.bf16.mxu0 %v1451
  %1501 = vmatpush1.bf16.msra.mxu0 %v1450
  %1502 = vmatprep.subr.bf16.mxu0 0
  %1503 = vmatpush1.bf16.msra.mxu0 0
  %1504 = vmatprep.subr.bf16.mxu0 0
  %1505 = vmatpush1.bf16.msra.mxu0 0
  %1506 = vmatprep.subr.bf16.mxu0 0
  %1507 = vmatpush1.bf16.msra.mxu0 0
  %1508 = vmatprep.subr.bf16.mxu0 0
  %1509 = vmatpush1.bf16.msra.mxu0 0
  %1510 = vmatprep.subr.bf16.mxu0 0
  %1511 = vmatpush1.bf16.msra.mxu0 0
  %1512 = vmatprep.subr.bf16.mxu0 0
  %1513 = vmatpush1.bf16.msra.mxu0 0
  %1514 = vmatprep.subr.bf16.mxu0 0
  %1515 = vmatpush1.bf16.msra.mxu0 0
  %1516 = vmatprep.subr.bf16.mxu0 0
  %1517 = vmatpush1.bf16.msra.mxu0 0
  %1518 = vmatprep.mubr.bf16.mxu0 0
  %1519 = vmatmul.mubr.bf16.gmra.mrb[0].mxu0 %v1293
  %v1520 = vpop.f32.mrb[0].mxu0
  %v1521 = vadd.f32 0.0, %v1520
  %v1522 = vpop.f32.mrb[0].mxu0
  %v1523 = vadd.f32 0.0, %v1522
  %v1524 = vpop.f32.mrb[0].mxu0
  %v1525 = vpop.f32.mrb[0].mxu0
  %1526 = vdwg.mxu0
  %1527 = vmatprep.subr.bf16.mxu0 %v1425
  %1528 = vmatpush1.bf16.msra.mxu0 %v1424
  %1529 = vmatprep.subr.bf16.mxu0 %v1429
  %1530 = vmatpush1.bf16.msra.mxu0 %v1428
  %1531 = vmatprep.subr.bf16.mxu0 %v1433
  %1532 = vmatpush1.bf16.msra.mxu0 %v1432
  %1533 = vmatprep.subr.bf16.mxu0 %v1437
  %1534 = vmatpush1.bf16.msra.mxu0 %v1436
  %1535 = vmatprep.subr.bf16.mxu0 %v1441
  %1536 = vmatpush1.bf16.msra.mxu0 %v1440
  %1537 = vmatprep.subr.bf16.mxu0 %v1445
  %1538 = vmatpush1.bf16.msra.mxu0 %v1444
  %1539 = vmatprep.subr.bf16.mxu0 %v1449
  %1540 = vmatpush1.bf16.msra.mxu0 %v1448
  %1541 = vmatprep.subr.bf16.mxu0 %v1453
  %1542 = vmatpush1.bf16.msra.mxu0 %v1452
  %1543 = vmatprep.subr.bf16.mxu0 0
  %1544 = vmatpush1.bf16.msra.mxu0 0
  %1545 = vmatprep.subr.bf16.mxu0 0
  %1546 = vmatpush1.bf16.msra.mxu0 0
  %1547 = vmatprep.subr.bf16.mxu0 0
  %1548 = vmatpush1.bf16.msra.mxu0 0
  %1549 = vmatprep.subr.bf16.mxu0 0
  %1550 = vmatpush1.bf16.msra.mxu0 0
  %1551 = vmatprep.subr.bf16.mxu0 0
  %1552 = vmatpush1.bf16.msra.mxu0 0
  %1553 = vmatprep.subr.bf16.mxu0 0
  %1554 = vmatpush1.bf16.msra.mxu0 0
  %1555 = vmatprep.subr.bf16.mxu0 0
  %1556 = vmatpush1.bf16.msra.mxu0 0
  %1557 = vmatprep.subr.bf16.mxu0 0
  %1558 = vmatpush1.bf16.msra.mxu0 0
  %1559 = vmatprep.mubr.bf16.mxu0 0
  %1560 = vmatmul.mubr.bf16.gmra.mrb[0].mxu0 %v1293
  %v1561 = vpop.f32.mrb[0].mxu0
  %v1562 = vadd.f32 0.0, %v1561
  %v1563 = vpop.f32.mrb[0].mxu0
  %v1564 = vadd.f32 0.0, %v1563
  %v1565 = vpop.f32.mrb[0].mxu0
  %v1566 = vpop.f32.mrb[0].mxu0
  %1567 = vdwg.mxu0
  %v1568 = vadd.f32 %v1289, %v1521
  %v1569 = vadd.f32 %v1290, %v1523
  %v1570 = vadd.f32 %v1291, %v1562
  %v1571 = vadd.f32 %v1292, %v1564
  %v1572 = vxor.u32 %v1568, 2147483648
  %v1573 = vmul.f32 %v1572, 1.442695
  %v1574 = vpow.pop %v1573
  %v1575 = vadd.f32 %v1574, 1.0
  %v1576 = vrcp.pop %v1575
  %v1577 = vmul.f32 1.0, %v1576
  %v1578 = vxor.u32 %v1569, 2147483648
  %v1579 = vmul.f32 %v1578, 1.442695
  %v1580 = vpow.pop %v1579
  %v1581 = vadd.f32 %v1580, 1.0
  %v1582 = vrcp.pop %v1581
  %v1583 = vmul.f32 1.0, %v1582
  %v1584 = vtanh.pop %v1570
  %v1585 = vxor.u32 %v1571, 2147483648
  %v1586 = vmul.f32 %v1585, 1.442695
  %v1587 = vpow.pop %v1586
  %v1588 = vadd.f32 %v1587, 1.0
  %v1589 = vrcp.pop %v1588
  %v1590 = vmul.f32 1.0, %v1589
  %v1591 = vmul.f32 %v1583, %v1287
  %v1592 = vmul.f32 %v1577, %v1584
  %v1593 = vadd.f32 %v1591, %v1592
  %v1594 = vtanh.pop %v1593
  %v1595 = vmul.f32 %v1590, %v1594
  %s1596 = scalar_lea.vmem %s2, 32
  %1597 = vst [vmem:[%s1596] sm:$0xff] %v1595
  %s1598 = sadd.s32 %s20, 4
  %p1599 = scmp.lt.s32.totalorder %s1598, 8
  %s1600 = scalar_select %p1599, 1, 0
  %v1601 = vstv %s1600
  %vm1602 = vcmp.eq.s32.totalorder %v1601, 1
  %v1603 = vsel %vm1602, %v1595, %v1286
  %v1604 = vsel %vm1602, %v1593, %v1287
  %s1605 = scalar_lea.vmem %s0, 160
  %v1606 = vld [vmem:[%s1605] sm:$0xff]
  %v1607 = vld [vmem:[%s1605 + $0x8] sm:$0xff]
  %v1608 = vld [vmem:[%s1605 + $0x10] sm:$0xff]
  %v1609 = vld [vmem:[%s1605 + $0x18] sm:$0xff]
  %v1610 = vpack.c.bf16 %v1603, %v1603
  %v1611 = vld [vmem:[%s1] sm:$0xff]
  %v1612 = vld [vmem:[%s1 + $0x8] sm:$0xff]
  %v1613 = vld [vmem:[%s1 + $0x10] sm:$0xff]
  %v1614 = vld [vmem:[%s1 + $0x18] sm:$0xff]
  %v1615 = vld [vmem:[%s1 + $0x20] sm:$0xff]
  %v1616 = vld [vmem:[%s1 + $0x28] sm:$0xff]
  %v1617 = vld [vmem:[%s1 + $0x30] sm:$0xff]
  %v1618 = vld [vmem:[%s1 + $0x38] sm:$0xff]
  %v1619 = vld [vmem:[%s1 + $0x40] sm:$0xff]
  %v1620 = vld [vmem:[%s1 + $0x48] sm:$0xff]
  %v1621 = vld [vmem:[%s1 + $0x50] sm:$0xff]
  %v1622 = vld [vmem:[%s1 + $0x58] sm:$0xff]
  %v1623 = vld [vmem:[%s1 + $0x60] sm:$0xff]
  %v1624 = vld [vmem:[%s1 + $0x68] sm:$0xff]
  %v1625 = vld [vmem:[%s1 + $0x70] sm:$0xff]
  %v1626 = vld [vmem:[%s1 + $0x78] sm:$0xff]
  %v1627 = vld [vmem:[%s1 + $0x80] sm:$0xff]
  %v1628 = vld [vmem:[%s1 + $0x88] sm:$0xff]
  %v1629 = vld [vmem:[%s1 + $0x90] sm:$0xff]
  %v1630 = vld [vmem:[%s1 + $0x98] sm:$0xff]
  %v1631 = vld [vmem:[%s1 + $0xa0] sm:$0xff]
  %v1632 = vld [vmem:[%s1 + $0xa8] sm:$0xff]
  %v1633 = vld [vmem:[%s1 + $0xb0] sm:$0xff]
  %v1634 = vld [vmem:[%s1 + $0xb8] sm:$0xff]
  %v1635 = vld [vmem:[%s1 + $0xc0] sm:$0xff]
  %v1636 = vld [vmem:[%s1 + $0xc8] sm:$0xff]
  %v1637 = vld [vmem:[%s1 + $0xd0] sm:$0xff]
  %v1638 = vld [vmem:[%s1 + $0xd8] sm:$0xff]
  %v1639 = vld [vmem:[%s1 + $0xe0] sm:$0xff]
  %v1640 = vld [vmem:[%s1 + $0xe8] sm:$0xff]
  %v1641 = vld [vmem:[%s1 + $0xf0] sm:$0xff]
  %v1642 = vld [vmem:[%s1 + $0xf8] sm:$0xff]
  %v1675 = vunpack.c.l.b16 %v1611
  %v1676 = vunpack.c.h.b16 %v1611
  %v1677 = vunpack.c.l.b16 %v1612
  %v1678 = vunpack.c.h.b16 %v1612
  %v1679 = vunpack.c.l.b16 %v1613
  %v1680 = vunpack.c.h.b16 %v1613
  %v1681 = vunpack.c.l.b16 %v1614
  %v1682 = vunpack.c.h.b16 %v1614
  %v1683 = vunpack.c.l.b16 %v1615
  %v1684 = vunpack.c.h.b16 %v1615
  %v1685 = vunpack.c.l.b16 %v1616
  %v1686 = vunpack.c.h.b16 %v1616
  %v1687 = vunpack.c.l.b16 %v1617
  %v1688 = vunpack.c.h.b16 %v1617
  %v1689 = vunpack.c.l.b16 %v1618
  %v1690 = vunpack.c.h.b16 %v1618
  %v1691 = vunpack.c.l.b16 %v1619
  %v1692 = vunpack.c.h.b16 %v1619
  %v1693 = vunpack.c.l.b16 %v1620
  %v1694 = vunpack.c.h.b16 %v1620
  %v1695 = vunpack.c.l.b16 %v1621
  %v1696 = vunpack.c.h.b16 %v1621
  %v1697 = vunpack.c.l.b16 %v1622
  %v1698 = vunpack.c.h.b16 %v1622
  %v1699 = vunpack.c.l.b16 %v1623
  %v1700 = vunpack.c.h.b16 %v1623
  %v1701 = vunpack.c.l.b16 %v1624
  %v1702 = vunpack.c.h.b16 %v1624
  %v1703 = vunpack.c.l.b16 %v1625
  %v1704 = vunpack.c.h.b16 %v1625
  %v1705 = vunpack.c.l.b16 %v1626
  %v1706 = vunpack.c.h.b16 %v1626
  %v1707 = vunpack.c.l.b16 %v1627
  %v1708 = vunpack.c.h.b16 %v1627
  %v1709 = vunpack.c.l.b16 %v1628
  %v1710 = vunpack.c.h.b16 %v1628
  %v1711 = vunpack.c.l.b16 %v1629
  %v1712 = vunpack.c.h.b16 %v1629
  %v1713 = vunpack.c.l.b16 %v1630
  %v1714 = vunpack.c.h.b16 %v1630
  %v1715 = vunpack.c.l.b16 %v1631
  %v1716 = vunpack.c.h.b16 %v1631
  %v1717 = vunpack.c.l.b16 %v1632
  %v1718 = vunpack.c.h.b16 %v1632
  %v1719 = vunpack.c.l.b16 %v1633
  %v1720 = vunpack.c.h.b16 %v1633
  %v1721 = vunpack.c.l.b16 %v1634
  %v1722 = vunpack.c.h.b16 %v1634
  %v1723 = vunpack.c.l.b16 %v1635
  %v1724 = vunpack.c.h.b16 %v1635
  %v1725 = vunpack.c.l.b16 %v1636
  %v1726 = vunpack.c.h.b16 %v1636
  %v1727 = vunpack.c.l.b16 %v1637
  %v1728 = vunpack.c.h.b16 %v1637
  %v1729 = vunpack.c.l.b16 %v1638
  %v1730 = vunpack.c.h.b16 %v1638
  %v1731 = vunpack.c.l.b16 %v1639
  %v1732 = vunpack.c.h.b16 %v1639
  %v1733 = vunpack.c.l.b16 %v1640
  %v1734 = vunpack.c.h.b16 %v1640
  %v1735 = vunpack.c.l.b16 %v1641
  %v1736 = vunpack.c.h.b16 %v1641
  %v1737 = vunpack.c.l.b16 %v1642
  %v1738 = vunpack.c.h.b16 %v1642
  %v1739 = vpack.c.b16 %v1679, %v1675
  %v1740 = vpack.c.b16 %v1680, %v1676
  %v1741 = vpack.c.b16 %v1681, %v1677
  %v1742 = vpack.c.b16 %v1682, %v1678
  %v1743 = vpack.c.b16 %v1687, %v1683
  %v1744 = vpack.c.b16 %v1688, %v1684
  %v1745 = vpack.c.b16 %v1689, %v1685
  %v1746 = vpack.c.b16 %v1690, %v1686
  %v1747 = vpack.c.b16 %v1695, %v1691
  %v1748 = vpack.c.b16 %v1696, %v1692
  %v1749 = vpack.c.b16 %v1697, %v1693
  %v1750 = vpack.c.b16 %v1698, %v1694
  %v1751 = vpack.c.b16 %v1703, %v1699
  %v1752 = vpack.c.b16 %v1704, %v1700
  %v1753 = vpack.c.b16 %v1705, %v1701
  %v1754 = vpack.c.b16 %v1706, %v1702
  %v1755 = vpack.c.b16 %v1711, %v1707
  %v1756 = vpack.c.b16 %v1712, %v1708
  %v1757 = vpack.c.b16 %v1713, %v1709
  %v1758 = vpack.c.b16 %v1714, %v1710
  %v1759 = vpack.c.b16 %v1719, %v1715
  %v1760 = vpack.c.b16 %v1720, %v1716
  %v1761 = vpack.c.b16 %v1721, %v1717
  %v1762 = vpack.c.b16 %v1722, %v1718
  %v1763 = vpack.c.b16 %v1727, %v1723
  %v1764 = vpack.c.b16 %v1728, %v1724
  %v1765 = vpack.c.b16 %v1729, %v1725
  %v1766 = vpack.c.b16 %v1730, %v1726
  %v1767 = vpack.c.b16 %v1735, %v1731
  %v1768 = vpack.c.b16 %v1736, %v1732
  %v1769 = vpack.c.b16 %v1737, %v1733
  %v1770 = vpack.c.b16 %v1738, %v1734
  %1803 = vmatprep.subr.bf16.mxu0 %v1740
  %1804 = vmatpush1.bf16.msra.mxu0 %v1739
  %1805 = vmatprep.subr.bf16.mxu0 %v1744
  %1806 = vmatpush1.bf16.msra.mxu0 %v1743
  %1807 = vmatprep.subr.bf16.mxu0 %v1748
  %1808 = vmatpush1.bf16.msra.mxu0 %v1747
  %1809 = vmatprep.subr.bf16.mxu0 %v1752
  %1810 = vmatpush1.bf16.msra.mxu0 %v1751
  %1811 = vmatprep.subr.bf16.mxu0 %v1756
  %1812 = vmatpush1.bf16.msra.mxu0 %v1755
  %1813 = vmatprep.subr.bf16.mxu0 %v1760
  %1814 = vmatpush1.bf16.msra.mxu0 %v1759
  %1815 = vmatprep.subr.bf16.mxu0 %v1764
  %1816 = vmatpush1.bf16.msra.mxu0 %v1763
  %1817 = vmatprep.subr.bf16.mxu0 %v1768
  %1818 = vmatpush1.bf16.msra.mxu0 %v1767
  %1819 = vmatprep.subr.bf16.mxu0 0
  %1820 = vmatpush1.bf16.msra.mxu0 0
  %1821 = vmatprep.subr.bf16.mxu0 0
  %1822 = vmatpush1.bf16.msra.mxu0 0
  %1823 = vmatprep.subr.bf16.mxu0 0
  %1824 = vmatpush1.bf16.msra.mxu0 0
  %1825 = vmatprep.subr.bf16.mxu0 0
  %1826 = vmatpush1.bf16.msra.mxu0 0
  %1827 = vmatprep.subr.bf16.mxu0 0
  %1828 = vmatpush1.bf16.msra.mxu0 0
  %1829 = vmatprep.subr.bf16.mxu0 0
  %1830 = vmatpush1.bf16.msra.mxu0 0
  %1831 = vmatprep.subr.bf16.mxu0 0
  %1832 = vmatpush1.bf16.msra.mxu0 0
  %1833 = vmatprep.subr.bf16.mxu0 0
  %1834 = vmatpush1.bf16.msra.mxu0 0
  %1835 = vmatprep.mubr.bf16.mxu0 0
  %1836 = vmatmul.mubr.bf16.gmra.mrb[0].mxu0 %v1610
  %v1837 = vpop.f32.mrb[0].mxu0
  %v1838 = vadd.f32 0.0, %v1837
  %v1839 = vpop.f32.mrb[0].mxu0
  %v1840 = vadd.f32 0.0, %v1839
  %v1841 = vpop.f32.mrb[0].mxu0
  %v1842 = vpop.f32.mrb[0].mxu0
  %1843 = vdwg.mxu0
  %1844 = vmatprep.subr.bf16.mxu0 %v1742
  %1845 = vmatpush1.bf16.msra.mxu0 %v1741
  %1846 = vmatprep.subr.bf16.mxu0 %v1746
  %1847 = vmatpush1.bf16.msra.mxu0 %v1745
  %1848 = vmatprep.subr.bf16.mxu0 %v1750
  %1849 = vmatpush1.bf16.msra.mxu0 %v1749
  %1850 = vmatprep.subr.bf16.mxu0 %v1754
  %1851 = vmatpush1.bf16.msra.mxu0 %v1753
  %1852 = vmatprep.subr.bf16.mxu0 %v1758
  %1853 = vmatpush1.bf16.msra.mxu0 %v1757
  %1854 = vmatprep.subr.bf16.mxu0 %v1762
  %1855 = vmatpush1.bf16.msra.mxu0 %v1761
  %1856 = vmatprep.subr.bf16.mxu0 %v1766
  %1857 = vmatpush1.bf16.msra.mxu0 %v1765
  %1858 = vmatprep.subr.bf16.mxu0 %v1770
  %1859 = vmatpush1.bf16.msra.mxu0 %v1769
  %1860 = vmatprep.subr.bf16.mxu0 0
  %1861 = vmatpush1.bf16.msra.mxu0 0
  %1862 = vmatprep.subr.bf16.mxu0 0
  %1863 = vmatpush1.bf16.msra.mxu0 0
  %1864 = vmatprep.subr.bf16.mxu0 0
  %1865 = vmatpush1.bf16.msra.mxu0 0
  %1866 = vmatprep.subr.bf16.mxu0 0
  %1867 = vmatpush1.bf16.msra.mxu0 0
  %1868 = vmatprep.subr.bf16.mxu0 0
  %1869 = vmatpush1.bf16.msra.mxu0 0
  %1870 = vmatprep.subr.bf16.mxu0 0
  %1871 = vmatpush1.bf16.msra.mxu0 0
  %1872 = vmatprep.subr.bf16.mxu0 0
  %1873 = vmatpush1.bf16.msra.mxu0 0
  %1874 = vmatprep.subr.bf16.mxu0 0
  %1875 = vmatpush1.bf16.msra.mxu0 0
  %1876 = vmatprep.mubr.bf16.mxu0 0
  %1877 = vmatmul.mubr.bf16.gmra.mrb[0].mxu0 %v1610
  %v1878 = vpop.f32.mrb[0].mxu0
  %v1879 = vadd.f32 0.0, %v1878
  %v1880 = vpop.f32.mrb[0].mxu0
  %v1881 = vadd.f32 0.0, %v1880
  %v1882 = vpop.f32.mrb[0].mxu0
  %v1883 = vpop.f32.mrb[0].mxu0
  %1884 = vdwg.mxu0
  %v1885 = vadd.f32 %v1606, %v1838
  %v1886 = vadd.f32 %v1607, %v1840
  %v1887 = vadd.f32 %v1608, %v1879
  %v1888 = vadd.f32 %v1609, %v1881
  %v1889 = vxor.u32 %v1885, 2147483648
  %v1890 = vmul.f32 %v1889, 1.442695
  %v1891 = vpow.pop %v1890
  %v1892 = vadd.f32 %v1891, 1.0
  %v1893 = vrcp.pop %v1892
  %v1894 = vmul.f32 1.0, %v1893
  %v1895 = vxor.u32 %v1886, 2147483648
  %v1896 = vmul.f32 %v1895, 1.442695
  %v1897 = vpow.pop %v1896
  %v1898 = vadd.f32 %v1897, 1.0
  %v1899 = vrcp.pop %v1898
  %v1900 = vmul.f32 1.0, %v1899
  %v1901 = vtanh.pop %v1887
  %v1902 = vxor.u32 %v1888, 2147483648
  %v1903 = vmul.f32 %v1902, 1.442695
  %v1904 = vpow.pop %v1903
  %v1905 = vadd.f32 %v1904, 1.0
  %v1906 = vrcp.pop %v1905
  %v1907 = vmul.f32 1.0, %v1906
  %v1908 = vmul.f32 %v1900, %v1604
  %v1909 = vmul.f32 %v1894, %v1901
  %v1910 = vadd.f32 %v1908, %v1909
  %v1911 = vtanh.pop %v1910
  %v1912 = vmul.f32 %v1907, %v1911
  %s1913 = scalar_lea.vmem %s2, 40
  %1914 = vst [vmem:[%s1913] sm:$0xff] %v1912
  %s1915 = sadd.s32 %s20, 5
  %p1916 = scmp.lt.s32.totalorder %s1915, 8
  %s1917 = scalar_select %p1916, 1, 0
  %v1918 = vstv %s1917
  %vm1919 = vcmp.eq.s32.totalorder %v1918, 1
  %v1920 = vsel %vm1919, %v1912, %v1603
  %v1921 = vsel %vm1919, %v1910, %v1604
  %s1922 = scalar_lea.vmem %s0, 192
  %v1923 = vld [vmem:[%s1922] sm:$0xff]
  %v1924 = vld [vmem:[%s1922 + $0x8] sm:$0xff]
  %v1925 = vld [vmem:[%s1922 + $0x10] sm:$0xff]
  %v1926 = vld [vmem:[%s1922 + $0x18] sm:$0xff]
  %v1927 = vpack.c.bf16 %v1920, %v1920
  %v1928 = vld [vmem:[%s1] sm:$0xff]
  %v1929 = vld [vmem:[%s1 + $0x8] sm:$0xff]
  %v1930 = vld [vmem:[%s1 + $0x10] sm:$0xff]
  %v1931 = vld [vmem:[%s1 + $0x18] sm:$0xff]
  %v1932 = vld [vmem:[%s1 + $0x20] sm:$0xff]
  %v1933 = vld [vmem:[%s1 + $0x28] sm:$0xff]
  %v1934 = vld [vmem:[%s1 + $0x30] sm:$0xff]
  %v1935 = vld [vmem:[%s1 + $0x38] sm:$0xff]
  %v1936 = vld [vmem:[%s1 + $0x40] sm:$0xff]
  %v1937 = vld [vmem:[%s1 + $0x48] sm:$0xff]
  %v1938 = vld [vmem:[%s1 + $0x50] sm:$0xff]
  %v1939 = vld [vmem:[%s1 + $0x58] sm:$0xff]
  %v1940 = vld [vmem:[%s1 + $0x60] sm:$0xff]
  %v1941 = vld [vmem:[%s1 + $0x68] sm:$0xff]
  %v1942 = vld [vmem:[%s1 + $0x70] sm:$0xff]
  %v1943 = vld [vmem:[%s1 + $0x78] sm:$0xff]
  %v1944 = vld [vmem:[%s1 + $0x80] sm:$0xff]
  %v1945 = vld [vmem:[%s1 + $0x88] sm:$0xff]
  %v1946 = vld [vmem:[%s1 + $0x90] sm:$0xff]
  %v1947 = vld [vmem:[%s1 + $0x98] sm:$0xff]
  %v1948 = vld [vmem:[%s1 + $0xa0] sm:$0xff]
  %v1949 = vld [vmem:[%s1 + $0xa8] sm:$0xff]
  %v1950 = vld [vmem:[%s1 + $0xb0] sm:$0xff]
  %v1951 = vld [vmem:[%s1 + $0xb8] sm:$0xff]
  %v1952 = vld [vmem:[%s1 + $0xc0] sm:$0xff]
  %v1953 = vld [vmem:[%s1 + $0xc8] sm:$0xff]
  %v1954 = vld [vmem:[%s1 + $0xd0] sm:$0xff]
  %v1955 = vld [vmem:[%s1 + $0xd8] sm:$0xff]
  %v1956 = vld [vmem:[%s1 + $0xe0] sm:$0xff]
  %v1957 = vld [vmem:[%s1 + $0xe8] sm:$0xff]
  %v1958 = vld [vmem:[%s1 + $0xf0] sm:$0xff]
  %v1959 = vld [vmem:[%s1 + $0xf8] sm:$0xff]
  %v1992 = vunpack.c.l.b16 %v1928
  %v1993 = vunpack.c.h.b16 %v1928
  %v1994 = vunpack.c.l.b16 %v1929
  %v1995 = vunpack.c.h.b16 %v1929
  %v1996 = vunpack.c.l.b16 %v1930
  %v1997 = vunpack.c.h.b16 %v1930
  %v1998 = vunpack.c.l.b16 %v1931
  %v1999 = vunpack.c.h.b16 %v1931
  %v2000 = vunpack.c.l.b16 %v1932
  %v2001 = vunpack.c.h.b16 %v1932
  %v2002 = vunpack.c.l.b16 %v1933
  %v2003 = vunpack.c.h.b16 %v1933
  %v2004 = vunpack.c.l.b16 %v1934
  %v2005 = vunpack.c.h.b16 %v1934
  %v2006 = vunpack.c.l.b16 %v1935
  %v2007 = vunpack.c.h.b16 %v1935
  %v2008 = vunpack.c.l.b16 %v1936
  %v2009 = vunpack.c.h.b16 %v1936
  %v2010 = vunpack.c.l.b16 %v1937
  %v2011 = vunpack.c.h.b16 %v1937
  %v2012 = vunpack.c.l.b16 %v1938
  %v2013 = vunpack.c.h.b16 %v1938
  %v2014 = vunpack.c.l.b16 %v1939
  %v2015 = vunpack.c.h.b16 %v1939
  %v2016 = vunpack.c.l.b16 %v1940
  %v2017 = vunpack.c.h.b16 %v1940
  %v2018 = vunpack.c.l.b16 %v1941
  %v2019 = vunpack.c.h.b16 %v1941
  %v2020 = vunpack.c.l.b16 %v1942
  %v2021 = vunpack.c.h.b16 %v1942
  %v2022 = vunpack.c.l.b16 %v1943
  %v2023 = vunpack.c.h.b16 %v1943
  %v2024 = vunpack.c.l.b16 %v1944
  %v2025 = vunpack.c.h.b16 %v1944
  %v2026 = vunpack.c.l.b16 %v1945
  %v2027 = vunpack.c.h.b16 %v1945
  %v2028 = vunpack.c.l.b16 %v1946
  %v2029 = vunpack.c.h.b16 %v1946
  %v2030 = vunpack.c.l.b16 %v1947
  %v2031 = vunpack.c.h.b16 %v1947
  %v2032 = vunpack.c.l.b16 %v1948
  %v2033 = vunpack.c.h.b16 %v1948
  %v2034 = vunpack.c.l.b16 %v1949
  %v2035 = vunpack.c.h.b16 %v1949
  %v2036 = vunpack.c.l.b16 %v1950
  %v2037 = vunpack.c.h.b16 %v1950
  %v2038 = vunpack.c.l.b16 %v1951
  %v2039 = vunpack.c.h.b16 %v1951
  %v2040 = vunpack.c.l.b16 %v1952
  %v2041 = vunpack.c.h.b16 %v1952
  %v2042 = vunpack.c.l.b16 %v1953
  %v2043 = vunpack.c.h.b16 %v1953
  %v2044 = vunpack.c.l.b16 %v1954
  %v2045 = vunpack.c.h.b16 %v1954
  %v2046 = vunpack.c.l.b16 %v1955
  %v2047 = vunpack.c.h.b16 %v1955
  %v2048 = vunpack.c.l.b16 %v1956
  %v2049 = vunpack.c.h.b16 %v1956
  %v2050 = vunpack.c.l.b16 %v1957
  %v2051 = vunpack.c.h.b16 %v1957
  %v2052 = vunpack.c.l.b16 %v1958
  %v2053 = vunpack.c.h.b16 %v1958
  %v2054 = vunpack.c.l.b16 %v1959
  %v2055 = vunpack.c.h.b16 %v1959
  %v2056 = vpack.c.b16 %v1996, %v1992
  %v2057 = vpack.c.b16 %v1997, %v1993
  %v2058 = vpack.c.b16 %v1998, %v1994
  %v2059 = vpack.c.b16 %v1999, %v1995
  %v2060 = vpack.c.b16 %v2004, %v2000
  %v2061 = vpack.c.b16 %v2005, %v2001
  %v2062 = vpack.c.b16 %v2006, %v2002
  %v2063 = vpack.c.b16 %v2007, %v2003
  %v2064 = vpack.c.b16 %v2012, %v2008
  %v2065 = vpack.c.b16 %v2013, %v2009
  %v2066 = vpack.c.b16 %v2014, %v2010
  %v2067 = vpack.c.b16 %v2015, %v2011
  %v2068 = vpack.c.b16 %v2020, %v2016
  %v2069 = vpack.c.b16 %v2021, %v2017
  %v2070 = vpack.c.b16 %v2022, %v2018
  %v2071 = vpack.c.b16 %v2023, %v2019
  %v2072 = vpack.c.b16 %v2028, %v2024
  %v2073 = vpack.c.b16 %v2029, %v2025
  %v2074 = vpack.c.b16 %v2030, %v2026
  %v2075 = vpack.c.b16 %v2031, %v2027
  %v2076 = vpack.c.b16 %v2036, %v2032
  %v2077 = vpack.c.b16 %v2037, %v2033
  %v2078 = vpack.c.b16 %v2038, %v2034
  %v2079 = vpack.c.b16 %v2039, %v2035
  %v2080 = vpack.c.b16 %v2044, %v2040
  %v2081 = vpack.c.b16 %v2045, %v2041
  %v2082 = vpack.c.b16 %v2046, %v2042
  %v2083 = vpack.c.b16 %v2047, %v2043
  %v2084 = vpack.c.b16 %v2052, %v2048
  %v2085 = vpack.c.b16 %v2053, %v2049
  %v2086 = vpack.c.b16 %v2054, %v2050
  %v2087 = vpack.c.b16 %v2055, %v2051
  %2120 = vmatprep.subr.bf16.mxu0 %v2057
  %2121 = vmatpush1.bf16.msra.mxu0 %v2056
  %2122 = vmatprep.subr.bf16.mxu0 %v2061
  %2123 = vmatpush1.bf16.msra.mxu0 %v2060
  %2124 = vmatprep.subr.bf16.mxu0 %v2065
  %2125 = vmatpush1.bf16.msra.mxu0 %v2064
  %2126 = vmatprep.subr.bf16.mxu0 %v2069
  %2127 = vmatpush1.bf16.msra.mxu0 %v2068
  %2128 = vmatprep.subr.bf16.mxu0 %v2073
  %2129 = vmatpush1.bf16.msra.mxu0 %v2072
  %2130 = vmatprep.subr.bf16.mxu0 %v2077
  %2131 = vmatpush1.bf16.msra.mxu0 %v2076
  %2132 = vmatprep.subr.bf16.mxu0 %v2081
  %2133 = vmatpush1.bf16.msra.mxu0 %v2080
  %2134 = vmatprep.subr.bf16.mxu0 %v2085
  %2135 = vmatpush1.bf16.msra.mxu0 %v2084
  %2136 = vmatprep.subr.bf16.mxu0 0
  %2137 = vmatpush1.bf16.msra.mxu0 0
  %2138 = vmatprep.subr.bf16.mxu0 0
  %2139 = vmatpush1.bf16.msra.mxu0 0
  %2140 = vmatprep.subr.bf16.mxu0 0
  %2141 = vmatpush1.bf16.msra.mxu0 0
  %2142 = vmatprep.subr.bf16.mxu0 0
  %2143 = vmatpush1.bf16.msra.mxu0 0
  %2144 = vmatprep.subr.bf16.mxu0 0
  %2145 = vmatpush1.bf16.msra.mxu0 0
  %2146 = vmatprep.subr.bf16.mxu0 0
  %2147 = vmatpush1.bf16.msra.mxu0 0
  %2148 = vmatprep.subr.bf16.mxu0 0
  %2149 = vmatpush1.bf16.msra.mxu0 0
  %2150 = vmatprep.subr.bf16.mxu0 0
  %2151 = vmatpush1.bf16.msra.mxu0 0
  %2152 = vmatprep.mubr.bf16.mxu0 0
  %2153 = vmatmul.mubr.bf16.gmra.mrb[0].mxu0 %v1927
  %v2154 = vpop.f32.mrb[0].mxu0
  %v2155 = vadd.f32 0.0, %v2154
  %v2156 = vpop.f32.mrb[0].mxu0
  %v2157 = vadd.f32 0.0, %v2156
  %v2158 = vpop.f32.mrb[0].mxu0
  %v2159 = vpop.f32.mrb[0].mxu0
  %2160 = vdwg.mxu0
  %2161 = vmatprep.subr.bf16.mxu0 %v2059
  %2162 = vmatpush1.bf16.msra.mxu0 %v2058
  %2163 = vmatprep.subr.bf16.mxu0 %v2063
  %2164 = vmatpush1.bf16.msra.mxu0 %v2062
  %2165 = vmatprep.subr.bf16.mxu0 %v2067
  %2166 = vmatpush1.bf16.msra.mxu0 %v2066
  %2167 = vmatprep.subr.bf16.mxu0 %v2071
  %2168 = vmatpush1.bf16.msra.mxu0 %v2070
  %2169 = vmatprep.subr.bf16.mxu0 %v2075
  %2170 = vmatpush1.bf16.msra.mxu0 %v2074
  %2171 = vmatprep.subr.bf16.mxu0 %v2079
  %2172 = vmatpush1.bf16.msra.mxu0 %v2078
  %2173 = vmatprep.subr.bf16.mxu0 %v2083
  %2174 = vmatpush1.bf16.msra.mxu0 %v2082
  %2175 = vmatprep.subr.bf16.mxu0 %v2087
  %2176 = vmatpush1.bf16.msra.mxu0 %v2086
  %2177 = vmatprep.subr.bf16.mxu0 0
  %2178 = vmatpush1.bf16.msra.mxu0 0
  %2179 = vmatprep.subr.bf16.mxu0 0
  %2180 = vmatpush1.bf16.msra.mxu0 0
  %2181 = vmatprep.subr.bf16.mxu0 0
  %2182 = vmatpush1.bf16.msra.mxu0 0
  %2183 = vmatprep.subr.bf16.mxu0 0
  %2184 = vmatpush1.bf16.msra.mxu0 0
  %2185 = vmatprep.subr.bf16.mxu0 0
  %2186 = vmatpush1.bf16.msra.mxu0 0
  %2187 = vmatprep.subr.bf16.mxu0 0
  %2188 = vmatpush1.bf16.msra.mxu0 0
  %2189 = vmatprep.subr.bf16.mxu0 0
  %2190 = vmatpush1.bf16.msra.mxu0 0
  %2191 = vmatprep.subr.bf16.mxu0 0
  %2192 = vmatpush1.bf16.msra.mxu0 0
  %2193 = vmatprep.mubr.bf16.mxu0 0
  %2194 = vmatmul.mubr.bf16.gmra.mrb[0].mxu0 %v1927
  %v2195 = vpop.f32.mrb[0].mxu0
  %v2196 = vadd.f32 0.0, %v2195
  %v2197 = vpop.f32.mrb[0].mxu0
  %v2198 = vadd.f32 0.0, %v2197
  %v2199 = vpop.f32.mrb[0].mxu0
  %v2200 = vpop.f32.mrb[0].mxu0
  %2201 = vdwg.mxu0
  %v2202 = vadd.f32 %v1923, %v2155
  %v2203 = vadd.f32 %v1924, %v2157
  %v2204 = vadd.f32 %v1925, %v2196
  %v2205 = vadd.f32 %v1926, %v2198
  %v2206 = vxor.u32 %v2202, 2147483648
  %v2207 = vmul.f32 %v2206, 1.442695
  %v2208 = vpow.pop %v2207
  %v2209 = vadd.f32 %v2208, 1.0
  %v2210 = vrcp.pop %v2209
  %v2211 = vmul.f32 1.0, %v2210
  %v2212 = vxor.u32 %v2203, 2147483648
  %v2213 = vmul.f32 %v2212, 1.442695
  %v2214 = vpow.pop %v2213
  %v2215 = vadd.f32 %v2214, 1.0
  %v2216 = vrcp.pop %v2215
  %v2217 = vmul.f32 1.0, %v2216
  %v2218 = vtanh.pop %v2204
  %v2219 = vxor.u32 %v2205, 2147483648
  %v2220 = vmul.f32 %v2219, 1.442695
  %v2221 = vpow.pop %v2220
  %v2222 = vadd.f32 %v2221, 1.0
  %v2223 = vrcp.pop %v2222
  %v2224 = vmul.f32 1.0, %v2223
  %v2225 = vmul.f32 %v2217, %v1921
  %v2226 = vmul.f32 %v2211, %v2218
  %v2227 = vadd.f32 %v2225, %v2226
  %v2228 = vtanh.pop %v2227
  %v2229 = vmul.f32 %v2224, %v2228
  %s2230 = scalar_lea.vmem %s2, 48
  %2231 = vst [vmem:[%s2230] sm:$0xff] %v2229
  %s2232 = sadd.s32 %s20, 6
  %p2233 = scmp.lt.s32.totalorder %s2232, 8
  %s2234 = scalar_select %p2233, 1, 0
  %v2235 = vstv %s2234
  %vm2236 = vcmp.eq.s32.totalorder %v2235, 1
  %v2237 = vsel %vm2236, %v2229, %v1920
  %v2238 = vsel %vm2236, %v2227, %v1921
  %s2239 = scalar_lea.vmem %s0, 224
  %v2240 = vld [vmem:[%s2239] sm:$0xff]
  %v2241 = vld [vmem:[%s2239 + $0x8] sm:$0xff]
  %v2242 = vld [vmem:[%s2239 + $0x10] sm:$0xff]
  %v2243 = vld [vmem:[%s2239 + $0x18] sm:$0xff]
  %v2244 = vpack.c.bf16 %v2237, %v2237
  %v2245 = vld [vmem:[%s1] sm:$0xff]
  %v2246 = vld [vmem:[%s1 + $0x8] sm:$0xff]
  %v2247 = vld [vmem:[%s1 + $0x10] sm:$0xff]
  %v2248 = vld [vmem:[%s1 + $0x18] sm:$0xff]
  %v2249 = vld [vmem:[%s1 + $0x20] sm:$0xff]
  %v2250 = vld [vmem:[%s1 + $0x28] sm:$0xff]
  %v2251 = vld [vmem:[%s1 + $0x30] sm:$0xff]
  %v2252 = vld [vmem:[%s1 + $0x38] sm:$0xff]
  %v2253 = vld [vmem:[%s1 + $0x40] sm:$0xff]
  %v2254 = vld [vmem:[%s1 + $0x48] sm:$0xff]
  %v2255 = vld [vmem:[%s1 + $0x50] sm:$0xff]
  %v2256 = vld [vmem:[%s1 + $0x58] sm:$0xff]
  %v2257 = vld [vmem:[%s1 + $0x60] sm:$0xff]
  %v2258 = vld [vmem:[%s1 + $0x68] sm:$0xff]
  %v2259 = vld [vmem:[%s1 + $0x70] sm:$0xff]
  %v2260 = vld [vmem:[%s1 + $0x78] sm:$0xff]
  %v2261 = vld [vmem:[%s1 + $0x80] sm:$0xff]
  %v2262 = vld [vmem:[%s1 + $0x88] sm:$0xff]
  %v2263 = vld [vmem:[%s1 + $0x90] sm:$0xff]
  %v2264 = vld [vmem:[%s1 + $0x98] sm:$0xff]
  %v2265 = vld [vmem:[%s1 + $0xa0] sm:$0xff]
  %v2266 = vld [vmem:[%s1 + $0xa8] sm:$0xff]
  %v2267 = vld [vmem:[%s1 + $0xb0] sm:$0xff]
  %v2268 = vld [vmem:[%s1 + $0xb8] sm:$0xff]
  %v2269 = vld [vmem:[%s1 + $0xc0] sm:$0xff]
  %v2270 = vld [vmem:[%s1 + $0xc8] sm:$0xff]
  %v2271 = vld [vmem:[%s1 + $0xd0] sm:$0xff]
  %v2272 = vld [vmem:[%s1 + $0xd8] sm:$0xff]
  %v2273 = vld [vmem:[%s1 + $0xe0] sm:$0xff]
  %v2274 = vld [vmem:[%s1 + $0xe8] sm:$0xff]
  %v2275 = vld [vmem:[%s1 + $0xf0] sm:$0xff]
  %v2276 = vld [vmem:[%s1 + $0xf8] sm:$0xff]
  %v2309 = vunpack.c.l.b16 %v2245
  %v2310 = vunpack.c.h.b16 %v2245
  %v2311 = vunpack.c.l.b16 %v2246
  %v2312 = vunpack.c.h.b16 %v2246
  %v2313 = vunpack.c.l.b16 %v2247
  %v2314 = vunpack.c.h.b16 %v2247
  %v2315 = vunpack.c.l.b16 %v2248
  %v2316 = vunpack.c.h.b16 %v2248
  %v2317 = vunpack.c.l.b16 %v2249
  %v2318 = vunpack.c.h.b16 %v2249
  %v2319 = vunpack.c.l.b16 %v2250
  %v2320 = vunpack.c.h.b16 %v2250
  %v2321 = vunpack.c.l.b16 %v2251
  %v2322 = vunpack.c.h.b16 %v2251
  %v2323 = vunpack.c.l.b16 %v2252
  %v2324 = vunpack.c.h.b16 %v2252
  %v2325 = vunpack.c.l.b16 %v2253
  %v2326 = vunpack.c.h.b16 %v2253
  %v2327 = vunpack.c.l.b16 %v2254
  %v2328 = vunpack.c.h.b16 %v2254
  %v2329 = vunpack.c.l.b16 %v2255
  %v2330 = vunpack.c.h.b16 %v2255
  %v2331 = vunpack.c.l.b16 %v2256
  %v2332 = vunpack.c.h.b16 %v2256
  %v2333 = vunpack.c.l.b16 %v2257
  %v2334 = vunpack.c.h.b16 %v2257
  %v2335 = vunpack.c.l.b16 %v2258
  %v2336 = vunpack.c.h.b16 %v2258
  %v2337 = vunpack.c.l.b16 %v2259
  %v2338 = vunpack.c.h.b16 %v2259
  %v2339 = vunpack.c.l.b16 %v2260
  %v2340 = vunpack.c.h.b16 %v2260
  %v2341 = vunpack.c.l.b16 %v2261
  %v2342 = vunpack.c.h.b16 %v2261
  %v2343 = vunpack.c.l.b16 %v2262
  %v2344 = vunpack.c.h.b16 %v2262
  %v2345 = vunpack.c.l.b16 %v2263
  %v2346 = vunpack.c.h.b16 %v2263
  %v2347 = vunpack.c.l.b16 %v2264
  %v2348 = vunpack.c.h.b16 %v2264
  %v2349 = vunpack.c.l.b16 %v2265
  %v2350 = vunpack.c.h.b16 %v2265
  %v2351 = vunpack.c.l.b16 %v2266
  %v2352 = vunpack.c.h.b16 %v2266
  %v2353 = vunpack.c.l.b16 %v2267
  %v2354 = vunpack.c.h.b16 %v2267
  %v2355 = vunpack.c.l.b16 %v2268
  %v2356 = vunpack.c.h.b16 %v2268
  %v2357 = vunpack.c.l.b16 %v2269
  %v2358 = vunpack.c.h.b16 %v2269
  %v2359 = vunpack.c.l.b16 %v2270
  %v2360 = vunpack.c.h.b16 %v2270
  %v2361 = vunpack.c.l.b16 %v2271
  %v2362 = vunpack.c.h.b16 %v2271
  %v2363 = vunpack.c.l.b16 %v2272
  %v2364 = vunpack.c.h.b16 %v2272
  %v2365 = vunpack.c.l.b16 %v2273
  %v2366 = vunpack.c.h.b16 %v2273
  %v2367 = vunpack.c.l.b16 %v2274
  %v2368 = vunpack.c.h.b16 %v2274
  %v2369 = vunpack.c.l.b16 %v2275
  %v2370 = vunpack.c.h.b16 %v2275
  %v2371 = vunpack.c.l.b16 %v2276
  %v2372 = vunpack.c.h.b16 %v2276
  %v2373 = vpack.c.b16 %v2313, %v2309
  %v2374 = vpack.c.b16 %v2314, %v2310
  %v2375 = vpack.c.b16 %v2315, %v2311
  %v2376 = vpack.c.b16 %v2316, %v2312
  %v2377 = vpack.c.b16 %v2321, %v2317
  %v2378 = vpack.c.b16 %v2322, %v2318
  %v2379 = vpack.c.b16 %v2323, %v2319
  %v2380 = vpack.c.b16 %v2324, %v2320
  %v2381 = vpack.c.b16 %v2329, %v2325
  %v2382 = vpack.c.b16 %v2330, %v2326
  %v2383 = vpack.c.b16 %v2331, %v2327
  %v2384 = vpack.c.b16 %v2332, %v2328
  %v2385 = vpack.c.b16 %v2337, %v2333
  %v2386 = vpack.c.b16 %v2338, %v2334
  %v2387 = vpack.c.b16 %v2339, %v2335
  %v2388 = vpack.c.b16 %v2340, %v2336
  %v2389 = vpack.c.b16 %v2345, %v2341
  %v2390 = vpack.c.b16 %v2346, %v2342
  %v2391 = vpack.c.b16 %v2347, %v2343
  %v2392 = vpack.c.b16 %v2348, %v2344
  %v2393 = vpack.c.b16 %v2353, %v2349
  %v2394 = vpack.c.b16 %v2354, %v2350
  %v2395 = vpack.c.b16 %v2355, %v2351
  %v2396 = vpack.c.b16 %v2356, %v2352
  %v2397 = vpack.c.b16 %v2361, %v2357
  %v2398 = vpack.c.b16 %v2362, %v2358
  %v2399 = vpack.c.b16 %v2363, %v2359
  %v2400 = vpack.c.b16 %v2364, %v2360
  %v2401 = vpack.c.b16 %v2369, %v2365
  %v2402 = vpack.c.b16 %v2370, %v2366
  %v2403 = vpack.c.b16 %v2371, %v2367
  %v2404 = vpack.c.b16 %v2372, %v2368
  %2437 = vmatprep.subr.bf16.mxu0 %v2374
  %2438 = vmatpush1.bf16.msra.mxu0 %v2373
  %2439 = vmatprep.subr.bf16.mxu0 %v2378
  %2440 = vmatpush1.bf16.msra.mxu0 %v2377
  %2441 = vmatprep.subr.bf16.mxu0 %v2382
  %2442 = vmatpush1.bf16.msra.mxu0 %v2381
  %2443 = vmatprep.subr.bf16.mxu0 %v2386
  %2444 = vmatpush1.bf16.msra.mxu0 %v2385
  %2445 = vmatprep.subr.bf16.mxu0 %v2390
  %2446 = vmatpush1.bf16.msra.mxu0 %v2389
  %2447 = vmatprep.subr.bf16.mxu0 %v2394
  %2448 = vmatpush1.bf16.msra.mxu0 %v2393
  %2449 = vmatprep.subr.bf16.mxu0 %v2398
  %2450 = vmatpush1.bf16.msra.mxu0 %v2397
  %2451 = vmatprep.subr.bf16.mxu0 %v2402
  %2452 = vmatpush1.bf16.msra.mxu0 %v2401
  %2453 = vmatprep.subr.bf16.mxu0 0
  %2454 = vmatpush1.bf16.msra.mxu0 0
  %2455 = vmatprep.subr.bf16.mxu0 0
  %2456 = vmatpush1.bf16.msra.mxu0 0
  %2457 = vmatprep.subr.bf16.mxu0 0
  %2458 = vmatpush1.bf16.msra.mxu0 0
  %2459 = vmatprep.subr.bf16.mxu0 0
  %2460 = vmatpush1.bf16.msra.mxu0 0
  %2461 = vmatprep.subr.bf16.mxu0 0
  %2462 = vmatpush1.bf16.msra.mxu0 0
  %2463 = vmatprep.subr.bf16.mxu0 0
  %2464 = vmatpush1.bf16.msra.mxu0 0
  %2465 = vmatprep.subr.bf16.mxu0 0
  %2466 = vmatpush1.bf16.msra.mxu0 0
  %2467 = vmatprep.subr.bf16.mxu0 0
  %2468 = vmatpush1.bf16.msra.mxu0 0
  %2469 = vmatprep.mubr.bf16.mxu0 0
  %2470 = vmatmul.mubr.bf16.gmra.mrb[0].mxu0 %v2244
  %v2471 = vpop.f32.mrb[0].mxu0
  %v2472 = vadd.f32 0.0, %v2471
  %v2473 = vpop.f32.mrb[0].mxu0
  %v2474 = vadd.f32 0.0, %v2473
  %v2475 = vpop.f32.mrb[0].mxu0
  %v2476 = vpop.f32.mrb[0].mxu0
  %2477 = vdwg.mxu0
  %2478 = vmatprep.subr.bf16.mxu0 %v2376
  %2479 = vmatpush1.bf16.msra.mxu0 %v2375
  %2480 = vmatprep.subr.bf16.mxu0 %v2380
  %2481 = vmatpush1.bf16.msra.mxu0 %v2379
  %2482 = vmatprep.subr.bf16.mxu0 %v2384
  %2483 = vmatpush1.bf16.msra.mxu0 %v2383
  %2484 = vmatprep.subr.bf16.mxu0 %v2388
  %2485 = vmatpush1.bf16.msra.mxu0 %v2387
  %2486 = vmatprep.subr.bf16.mxu0 %v2392
  %2487 = vmatpush1.bf16.msra.mxu0 %v2391
  %2488 = vmatprep.subr.bf16.mxu0 %v2396
  %2489 = vmatpush1.bf16.msra.mxu0 %v2395
  %2490 = vmatprep.subr.bf16.mxu0 %v2400
  %2491 = vmatpush1.bf16.msra.mxu0 %v2399
  %2492 = vmatprep.subr.bf16.mxu0 %v2404
  %2493 = vmatpush1.bf16.msra.mxu0 %v2403
  %2494 = vmatprep.subr.bf16.mxu0 0
  %2495 = vmatpush1.bf16.msra.mxu0 0
  %2496 = vmatprep.subr.bf16.mxu0 0
  %2497 = vmatpush1.bf16.msra.mxu0 0
  %2498 = vmatprep.subr.bf16.mxu0 0
  %2499 = vmatpush1.bf16.msra.mxu0 0
  %2500 = vmatprep.subr.bf16.mxu0 0
  %2501 = vmatpush1.bf16.msra.mxu0 0
  %2502 = vmatprep.subr.bf16.mxu0 0
  %2503 = vmatpush1.bf16.msra.mxu0 0
  %2504 = vmatprep.subr.bf16.mxu0 0
  %2505 = vmatpush1.bf16.msra.mxu0 0
  %2506 = vmatprep.subr.bf16.mxu0 0
  %2507 = vmatpush1.bf16.msra.mxu0 0
  %2508 = vmatprep.subr.bf16.mxu0 0
  %2509 = vmatpush1.bf16.msra.mxu0 0
  %2510 = vmatprep.mubr.bf16.mxu0 0
  %2511 = vmatmul.mubr.bf16.gmra.mrb[0].mxu0 %v2244
  %v2512 = vpop.f32.mrb[0].mxu0
  %v2513 = vadd.f32 0.0, %v2512
  %v2514 = vpop.f32.mrb[0].mxu0
  %v2515 = vadd.f32 0.0, %v2514
  %v2516 = vpop.f32.mrb[0].mxu0
  %v2517 = vpop.f32.mrb[0].mxu0
  %2518 = vdwg.mxu0
  %v2519 = vadd.f32 %v2240, %v2472
  %v2520 = vadd.f32 %v2241, %v2474
  %v2521 = vadd.f32 %v2242, %v2513
  %v2522 = vadd.f32 %v2243, %v2515
  %v2523 = vxor.u32 %v2519, 2147483648
  %v2524 = vmul.f32 %v2523, 1.442695
  %v2525 = vpow.pop %v2524
  %v2526 = vadd.f32 %v2525, 1.0
  %v2527 = vrcp.pop %v2526
  %v2528 = vmul.f32 1.0, %v2527
  %v2529 = vxor.u32 %v2520, 2147483648
  %v2530 = vmul.f32 %v2529, 1.442695
  %v2531 = vpow.pop %v2530
  %v2532 = vadd.f32 %v2531, 1.0
  %v2533 = vrcp.pop %v2532
  %v2534 = vmul.f32 1.0, %v2533
  %v2535 = vtanh.pop %v2521
  %v2536 = vxor.u32 %v2522, 2147483648
  %v2537 = vmul.f32 %v2536, 1.442695
  %v2538 = vpow.pop %v2537
  %v2539 = vadd.f32 %v2538, 1.0
  %v2540 = vrcp.pop %v2539
  %v2541 = vmul.f32 1.0, %v2540
  %v2542 = vmul.f32 %v2534, %v2238
  %v2543 = vmul.f32 %v2528, %v2535
  %v2544 = vadd.f32 %v2542, %v2543
  %v2545 = vtanh.pop %v2544
  %v2546 = vmul.f32 %v2541, %v2545
  %s2547 = scalar_lea.vmem %s2, 56
  %2548 = vst [vmem:[%s2547] sm:$0xff] %v2546
  %s2549 = sadd.s32 %s20, 7
  %p2550 = scmp.lt.s32.totalorder %s2549, 8
  %s2551 = scalar_select %p2550, 1, 0
  %v2552 = vstv %s2551
  %vm2553 = vcmp.eq.s32.totalorder %v2552, 1
  %v2554 = vsel %vm2553, %v2546, %v2237
  %v2555 = vsel %vm2553, %v2544, %v2238
  %2556 = vst [vmem:[#allocation2] sm:$0xff] %v2554
  %2557 = vst [vmem:[#allocation3] sm:$0xff] %v2555
  // Predicated region
  $region14: #{encoder_forward.1} parent=0 // pred_check
    %p2558 = pneg %p14
  $region15: #{encoder_forward.1} parent=0 // pred_check_branch
    %2560 = sbr.rel (%p2558) target = $region17
  $region16: #{encoder_forward.1} parent=0 // pred_region
    %v2561 = vld [vmem:[#allocation3] sm:$0xff]
    %2562 = vst [vmem:[%s3] sm:$0xff] %v2561
  $region17: #{encoder_forward.1} parent=0 // pred_fallthru
    _
  // Predicated region
  $region18: #{encoder_forward.1} parent=0 // pred_check
    _
  $region19: #{encoder_forward.1} parent=0 // pred_check_branch
    %2564 = sbr.rel (0) target = $region21
  $region20: #{encoder_forward.1} parent=0 // pred_region
    _
  $region21: #{encoder_forward.1} parent=0 // pred_fallthru
    _
  // Predicated region
  $region22: #{encoder_forward.1} parent=0 // pred_check
    _
  $region23: #{encoder_forward.1} parent=0 // pred_check_branch
    %2566 = sbr.rel (0) target = $region25
  $region24: #{encoder_forward.1} parent=0 // pred_region
    _
  $region25: #{encoder_forward.1} parent=0 // pred_fallthru
    _
  // Predicated region
  $region26: #{encoder_forward.1} parent=0 // pred_check
    _
  $region27: #{encoder_forward.1} parent=0 // pred_check_branch
    %2568 = sbr.rel (0) target = $region29
  $region28: #{encoder_forward.1} parent=0 // pred_region
    _
  $region29: #{encoder_forward.1} parent=0 // pred_fallthru
    _
  // Predicated region
  $region30: #{encoder_forward.1} parent=0 // pred_check
    _
  $region31: #{encoder_forward.1} parent=0 // pred_check_branch
    %2570 = sbr.rel (0) target = $region33
  $region32: #{encoder_forward.1} parent=0 // pred_region
    _
  $region33: #{encoder_forward.1} parent=0 // pred_fallthru
    _

</llo_original>
